<compile_context>
chip_gen: v6e
topology: v6e:2x2x1
jax: 0.10.0
libtpu: 0.0.40
codegen_flags: <defaults>
</compile_context>

<pallas_src>
import jax
import jax.numpy as jnp
from jax import lax
from jax.experimental import pallas as pl
from jax.experimental.pallas import tpu as pltpu


def _ceil_to(n, m):
    return ((n + m - 1) // m) * m


def _padded_vmem_bytes(shape, dtype):
    """(8/16/32, 128)-tile-padded VMEM footprint of a block with this shape."""
    itemsize = jnp.dtype(dtype).itemsize
    sublane = max(8, 8 * (4 // max(itemsize, 1)))   # 8 f32 / 16 bf16 / 32 int8
    if len(shape) == 0:
        return itemsize
    if len(shape) == 1:
        return _ceil_to(shape[0], 128) * itemsize
    lead = 1
    for d in shape[:-2]:
        lead *= d
    return lead * _ceil_to(shape[-2], sublane) * _ceil_to(shape[-1], 128) * itemsize


def _vmem_budget():
    """Per-step tile budget + vmem_limit_bytes, TPU-generation aware."""
    cap = 64 * 1024 * 1024           # conservative default (v7x per-core VMEM)
    try:
        cap = int(pltpu.get_tpu_info().vmem_capacity_bytes)
    except Exception:                # no TPU device / interpret mode / older jax
        pass
    budget = max(2 * 1024 * 1024, cap // 8)          # ~8 MiB v7x, ~16 MiB v5e/v6e
    vmem_limit = min(cap * 3 // 4, 100 * 1024 * 1024)
    return budget, vmem_limit


def _pick_channels_per_step(B, C, pH, pW, oH, oW, W, dtype, compute_dtype,
                            budget_bytes):
    """Largest channel block TC (divisor of C) whose padded VMEM footprint fits."""
    def step_bytes(tc):
        in_b = 2 * _padded_vmem_bytes((tc, oH, pH * W), dtype)         # dbl-buffered
        out_b = 2 * _padded_vmem_bytes((tc, pH, pW, oH, oW), dtype)    # dbl-buffered
        s_b = 2 * _padded_vmem_bytes((pW, W, oW), compute_dtype)       # resident S
        m_rows = min(tc * oH, 512)
        tmp_b = (_padded_vmem_bytes((m_rows, W), jnp.float32)
                 + _padded_vmem_bytes((m_rows, oW), jnp.float32))      # live temporaries
        return in_b + out_b + s_b + tmp_b

    # Keep >= 2 grid steps so 2-TensorCore chips (v7x) get both cores busy.
    cap = C if B > 1 else max(1, C // 2)
    best = 1
    for d in range(1, cap + 1):
        if C % d == 0 and step_bytes(d) <= budget_bytes:
            best = d
    return best


def _pick_group_channels(TC, oH, max_m=512):
    """Channels batched into one matmul's M dimension (needs oH % 8 == 0)."""
    if oH % 8 != 0:
        return 1
    best = 1
    for d in range(1, TC + 1):
        if TC % d == 0 and d * oH <= max_m:
            best = d
    return best


def rev_ps_inverse(x, block_size):
    """Pallas implementation of RevPS_Inverse.forward (pixelshuffle_invert)."""
    B, C, H, W = x.shape
    pH = pW = int(block_size)
    assert H % pH == 0 and W % pW == 0, "spatial dims must be divisible by block_size"
    oH, oW = H // pH, W // pW

    if pH == 1 and pW == 1:
        return x

    compute_dtype = jnp.bfloat16 if x.dtype == jnp.bfloat16 else jnp.float32
    # 0/1 selection matrices are exact in bf16; the f32 operand needs the multi-pass
    # (HIGHEST) lowering so the permutation stays bit-exact on the MXU.
    precision = (lax.Precision.DEFAULT if compute_dtype == jnp.bfloat16
                 else lax.Precision.HIGHEST)

    budget, vmem_limit = _vmem_budget()
    TC = _pick_channels_per_step(B, C, pH, pW, oH, oW, W, x.dtype, compute_dtype,
                                 budget)
    KC = _pick_group_channels(TC, oH)
    n_groups = TC // KC

    # Free reshape: x3[b, c, i, ph*W + w] == x[b, c, i*pH + ph, w].
    x3 = x.reshape(B, C, oH, pH * W)

    # Column de-interleave matrices, built once outside the kernel:
    #   sel[pw, w, ow] = 1  iff  w == ow*pW + pw
    w_idx = jnp.arange(W, dtype=jnp.int32)[None, :, None]
    ow_idx = jnp.arange(oW, dtype=jnp.int32)[None, None, :]
    pw_idx = jnp.arange(pW, dtype=jnp.int32)[:, None, None]
    sel = (w_idx == ow_idx * pW + pw_idx).astype(compute_dtype)        # (pW, W, oW)

    def kernel(x_ref, s_ref, o_ref):
        # x_ref: (TC, oH, pH*W)         input rows, row-phase-major along lanes
        # s_ref: (pW, W, oW)            resident 0/1 selection matrices
        # o_ref: (TC, pH, pW, oH, oW)   output channels of this block
        def process(c0):
            for ph in range(pH):
                xg = x_ref[pl.ds(c0, KC), :, ph * W:(ph + 1) * W]      # (KC, oH, W)
                xg = xg.reshape(KC * oH, W).astype(compute_dtype)      # free: oH%8==0 if KC>1
                for pw in range(pW):
                    y = jnp.dot(xg, s_ref[pw], precision=precision,
                                preferred_element_type=jnp.float32)    # (KC*oH, oW)
                    o_ref[pl.ds(c0, KC), ph, pw] = (
                        y.reshape(KC, oH, oW).astype(o_ref.dtype))

        if n_groups == 1:
            process(0)
        else:
            def body(g, carry):
                process(pl.multiple_of(g * KC, KC))
                return carry
            lax.fori_loop(0, n_groups, body, 0)

    itemsize = jnp.dtype(x.dtype).itemsize
    out6 = pl.pallas_call(
        kernel,
        out_shape=jax.ShapeDtypeStruct((B, C, pH, pW, oH, oW), x.dtype),
        grid=(B, C // TC),
        in_specs=[
            pl.BlockSpec((None, TC, oH, pH * W), lambda b, cb: (b, cb, 0, 0)),
            # Constant index_map: DMA'd once, stays resident across all grid steps.
            pl.BlockSpec((pW, W, oW), lambda b, cb: (0, 0, 0)),
        ],
        out_specs=pl.BlockSpec((None, TC, pH, pW, oH, oW),
                               lambda b, cb: (b, cb, 0, 0, 0, 0)),
        compiler_params=pltpu.CompilerParams(
            dimension_semantics=("parallel", "parallel"),
            vmem_limit_bytes=vmem_limit,
        ),
        cost_estimate=pl.CostEstimate(
            flops=0, transcendentals=0,
            bytes_accessed=2 * B * C * H * W * itemsize),
    )(x3, sel)

    # Free reshape: (B, C, pH, pW, oH, oW) -> (B, C*pH*pW, oH, oW).
    return out6.reshape(B, C * pH * pW, oH, oW)


def _reference(x, block_size):
    """Pure-JAX reference reproducing pixelshuffle_invert semantics exactly."""
    B, C, H, W = x.shape
    p = block_size
    oH, oW = H // p, W // p
    y = x.reshape(B, C, oH, p, oW, p)
    y = jnp.transpose(y, (0, 1, 3, 5, 2, 4))   # B, C, pH, pW, oH, oW
    return y.reshape(B, C * p * p, oH, oW)


if __name__ == "__main__":
    block_size = 2
    B, C, H, W = 2, 4, 16, 16

    key = jax.random.PRNGKey(0)
    x = jax.random.normal(key, (B, C, H, W), dtype=jnp.float32)

    y = rev_ps_inverse(x, block_size)
    y = jax.block_until_ready(y)

    y_ref = _reference(x, block_size)
    assert y.shape == (B, C * block_size * block_size, H // block_size, W // block_size)
    assert y.dtype == x.dtype
    # Pure permutation -> bit-exact (per review: array_equal, not allclose).
    assert bool(jnp.array_equal(y, y_ref)), "mismatch vs reference"

    print("KERNEL_OK")
</pallas_src>

<mosaic_0001>
module attributes {stable_mosaic.version = 11 : i64} {
  func.func @kernel(%arg0: i32, %arg1: i32, %arg2: memref<1x4x8x32xf32, #tpu.memory_space<vmem>>, %arg3: memref<2x16x8xf32, #tpu.memory_space<vmem>>, %arg4: memref<1x4x2x2x8x8xf32, #tpu.memory_space<vmem>>) attributes {dimension_semantics = [#tpu.dimension_semantics<parallel>, #tpu.dimension_semantics<parallel>], iteration_bounds = array<i64: 2, 1>, scalar_prefetch = 0 : i64, scratch_operands = 0 : i64, tpu.core_type = #tpu.core_type<tc>, window_params = [{transform_indices = @transform_0, window_bounds = array<i64: 1, 4, 8, 32>}, {pipeline_mode = #tpu.pipeline_mode<synchronous>, transform_indices = @transform_1, window_bounds = array<i64: 2, 16, 8>}, {transform_indices = @transform_2, window_bounds = array<i64: 1, 4, 2, 2, 8, 8>}]} {
    %c0 = arith.constant 0 : index
    %c0_0 = arith.constant 0 : index
    %c0_1 = arith.constant 0 : index
    %c0_2 = arith.constant 0 : index
    %0 = vector.load %arg2[%c0, %c0_0, %c0_1, %c0_2] : memref<1x4x8x32xf32, #tpu.memory_space<vmem>>, vector<1x4x8x16xf32>
    %1 = vector.shape_cast %0 : vector<1x4x8x16xf32> to vector<4x8x16xf32>
    %2 = vector.shape_cast %1 : vector<4x8x16xf32> to vector<32x16xf32>
    %c0_3 = arith.constant 0 : index
    %c0_4 = arith.constant 0 : index
    %c0_5 = arith.constant 0 : index
    %3 = vector.load %arg3[%c0_3, %c0_4, %c0_5] : memref<2x16x8xf32, #tpu.memory_space<vmem>>, vector<1x16x8xf32>
    %4 = vector.shape_cast %3 : vector<1x16x8xf32> to vector<16x8xf32>
    %cst = arith.constant dense<0.000000e+00> : vector<32x8xf32>
    %5 = tpu.matmul %2, %4, %cst {dimension_numbers = #tpu.dot_dimension_numbers<[1], [0], [0], [1], [0, 0, 1, 1], [], []>, precision = #tpu.contract_precision<fp32>} : vector<32x16xf32>, vector<16x8xf32>, vector<32x8xf32> -> vector<32x8xf32>
    %6 = vector.shape_cast %5 : vector<32x8xf32> to vector<4x8x8xf32>
    %c0_6 = arith.constant 0 : index
    %c0_7 = arith.constant 0 : index
    %c0_8 = arith.constant 0 : index
    %c0_9 = arith.constant 0 : index
    %c0_10 = arith.constant 0 : index
    %c0_11 = arith.constant 0 : index
    %7 = vector.load %arg4[%c0_6, %c0_7, %c0_8, %c0_9, %c0_10, %c0_11] : memref<1x4x2x2x8x8xf32, #tpu.memory_space<vmem>>, vector<1x4x1x1x8x8xf32>
    %8 = vector.shape_cast %7 : vector<1x4x1x1x8x8xf32> to vector<4x8x8xf32>
    %9 = vector.shape_cast %6 : vector<4x8x8xf32> to vector<1x4x1x1x8x8xf32>
    tpu.vector_store %arg4[%c0_6, %c0_7, %c0_8, %c0_9, %c0_10, %c0_11], %9 {strides = array<i32>} : memref<1x4x2x2x8x8xf32, #tpu.memory_space<vmem>>, vector<1x4x1x1x8x8xf32>,
    %c1 = arith.constant 1 : index
    %c0_12 = arith.constant 0 : index
    %c0_13 = arith.constant 0 : index
    %10 = vector.load %arg3[%c1, %c0_12, %c0_13] : memref<2x16x8xf32, #tpu.memory_space<vmem>>, vector<1x16x8xf32>
    %11 = vector.shape_cast %10 : vector<1x16x8xf32> to vector<16x8xf32>
    %cst_14 = arith.constant dense<0.000000e+00> : vector<32x8xf32>
    %12 = tpu.matmul %2, %11, %cst_14 {dimension_numbers = #tpu.dot_dimension_numbers<[1], [0], [0], [1], [0, 0, 1, 1], [], []>, precision = #tpu.contract_precision<fp32>} : vector<32x16xf32>, vector<16x8xf32>, vector<32x8xf32> -> vector<32x8xf32>
    %13 = vector.shape_cast %12 : vector<32x8xf32> to vector<4x8x8xf32>
    %c0_15 = arith.constant 0 : index
    %c0_16 = arith.constant 0 : index
    %c0_17 = arith.constant 0 : index
    %c1_18 = arith.constant 1 : index
    %c0_19 = arith.constant 0 : index
    %c0_20 = arith.constant 0 : index
    %14 = vector.load %arg4[%c0_15, %c0_16, %c0_17, %c1_18, %c0_19, %c0_20] : memref<1x4x2x2x8x8xf32, #tpu.memory_space<vmem>>, vector<1x4x1x1x8x8xf32>
    %15 = vector.shape_cast %14 : vector<1x4x1x1x8x8xf32> to vector<4x8x8xf32>
    %16 = vector.shape_cast %13 : vector<4x8x8xf32> to vector<1x4x1x1x8x8xf32>
    tpu.vector_store %arg4[%c0_15, %c0_16, %c0_17, %c1_18, %c0_19, %c0_20], %16 {strides = array<i32>} : memref<1x4x2x2x8x8xf32, #tpu.memory_space<vmem>>, vector<1x4x1x1x8x8xf32>,
    %c0_21 = arith.constant 0 : index
    %c0_22 = arith.constant 0 : index
    %c0_23 = arith.constant 0 : index
    %c16 = arith.constant 16 : index
    %17 = vector.load %arg2[%c0_21, %c0_22, %c0_23, %c16] : memref<1x4x8x32xf32, #tpu.memory_space<vmem>>, vector<1x4x8x16xf32>
    %18 = vector.shape_cast %17 : vector<1x4x8x16xf32> to vector<4x8x16xf32>
    %19 = vector.shape_cast %18 : vector<4x8x16xf32> to vector<32x16xf32>
    %c0_24 = arith.constant 0 : index
    %c0_25 = arith.constant 0 : index
    %c0_26 = arith.constant 0 : index
    %20 = vector.load %arg3[%c0_24, %c0_25, %c0_26] : memref<2x16x8xf32, #tpu.memory_space<vmem>>, vector<1x16x8xf32>
    %21 = vector.shape_cast %20 : vector<1x16x8xf32> to vector<16x8xf32>
    %cst_27 = arith.constant dense<0.000000e+00> : vector<32x8xf32>
    %22 = tpu.matmul %19, %21, %cst_27 {dimension_numbers = #tpu.dot_dimension_numbers<[1], [0], [0], [1], [0, 0, 1, 1], [], []>, precision = #tpu.contract_precision<fp32>} : vector<32x16xf32>, vector<16x8xf32>, vector<32x8xf32> -> vector<32x8xf32>
    %23 = vector.shape_cast %22 : vector<32x8xf32> to vector<4x8x8xf32>
    %c0_28 = arith.constant 0 : index
    %c0_29 = arith.constant 0 : index
    %c1_30 = arith.constant 1 : index
    %c0_31 = arith.constant 0 : index
    %c0_32 = arith.constant 0 : index
    %c0_33 = arith.constant 0 : index
    %24 = vector.load %arg4[%c0_28, %c0_29, %c1_30, %c0_31, %c0_32, %c0_33] : memref<1x4x2x2x8x8xf32, #tpu.memory_space<vmem>>, vector<1x4x1x1x8x8xf32>
    %25 = vector.shape_cast %24 : vector<1x4x1x1x8x8xf32> to vector<4x8x8xf32>
    %26 = vector.shape_cast %23 : vector<4x8x8xf32> to vector<1x4x1x1x8x8xf32>
    tpu.vector_store %arg4[%c0_28, %c0_29, %c1_30, %c0_31, %c0_32, %c0_33], %26 {strides = array<i32>} : memref<1x4x2x2x8x8xf32, #tpu.memory_space<vmem>>, vector<1x4x1x1x8x8xf32>,
    %c1_34 = arith.constant 1 : index
    %c0_35 = arith.constant 0 : index
    %c0_36 = arith.constant 0 : index
    %27 = vector.load %arg3[%c1_34, %c0_35, %c0_36] : memref<2x16x8xf32, #tpu.memory_space<vmem>>, vector<1x16x8xf32>
    %28 = vector.shape_cast %27 : vector<1x16x8xf32> to vector<16x8xf32>
    %cst_37 = arith.constant dense<0.000000e+00> : vector<32x8xf32>
    %29 = tpu.matmul %19, %28, %cst_37 {dimension_numbers = #tpu.dot_dimension_numbers<[1], [0], [0], [1], [0, 0, 1, 1], [], []>, precision = #tpu.contract_precision<fp32>} : vector<32x16xf32>, vector<16x8xf32>, vector<32x8xf32> -> vector<32x8xf32>
    %30 = vector.shape_cast %29 : vector<32x8xf32> to vector<4x8x8xf32>
    %c0_38 = arith.constant 0 : index
    %c0_39 = arith.constant 0 : index
    %c1_40 = arith.constant 1 : index
    %c1_41 = arith.constant 1 : index
    %c0_42 = arith.constant 0 : index
    %c0_43 = arith.constant 0 : index
    %31 = vector.load %arg4[%c0_38, %c0_39, %c1_40, %c1_41, %c0_42, %c0_43] : memref<1x4x2x2x8x8xf32, #tpu.memory_space<vmem>>, vector<1x4x1x1x8x8xf32>
    %32 = vector.shape_cast %31 : vector<1x4x1x1x8x8xf32> to vector<4x8x8xf32>
    %33 = vector.shape_cast %30 : vector<4x8x8xf32> to vector<1x4x1x1x8x8xf32>
    tpu.vector_store %arg4[%c0_38, %c0_39, %c1_40, %c1_41, %c0_42, %c0_43], %33 {strides = array<i32>} : memref<1x4x2x2x8x8xf32, #tpu.memory_space<vmem>>, vector<1x4x1x1x8x8xf32>,
    return
  }
  func.func @transform_0(%arg0: i32, %arg1: i32) -> (i32, i32, i32, i32) {
    %c0_i32 = arith.constant 0 : i32
    %c0_i32_0 = arith.constant 0 : i32
    %c0_i32_1 = arith.constant 0 : i32
    return %arg0, %arg1, %c0_i32, %c0_i32_0 : i32, i32, i32, i32
  }
  func.func @transform_1(%arg0: i32, %arg1: i32) -> (i32, i32, i32) {
    %c0_i32 = arith.constant 0 : i32
    %c0_i32_0 = arith.constant 0 : i32
    %c0_i32_1 = arith.constant 0 : i32
    %c0_i32_2 = arith.constant 0 : i32
    return %c0_i32, %c0_i32_0, %c0_i32_1 : i32, i32, i32
  }
  func.func @transform_2(%arg0: i32, %arg1: i32) -> (i32, i32, i32, i32, i32, i32) {
    %c0_i32 = arith.constant 0 : i32
    %c0_i32_0 = arith.constant 0 : i32
    %c0_i32_1 = arith.constant 0 : i32
    %c0_i32_2 = arith.constant 0 : i32
    %c0_i32_3 = arith.constant 0 : i32
    return %arg0, %arg1, %c0_i32, %c0_i32_0, %c0_i32_1, %c0_i32_2 : i32, i32, i32, i32, i32, i32
  }
}

</mosaic_0001>

<llo_original>
// kernel: tpu_custom_call.1
$region0: #{tpu_custom_call.1}
  #allocation0 [shape = 'u32[]', space=smem, size = 0x4, offset = 0x4, fixed_abs, tag = 'smem constant byte address 0x4 - core index']
  #allocation1 [shape = 'u32[144,128]{1,0:T(1,128)}', space=vmem, size = 0x12000, scoped, tag = 'internal scratch']
  %s0 = inlined_call_operand.hbm [shape: f32[2,4,8,32], index: 0, kind: input, shape index: {}]
  %s1 = inlined_call_operand.vmem [shape: f32[2,16,8], index: 1, kind: input, shape index: {}]
  %s2 = inlined_call_operand.hbm [shape: f32[2,4,2,2,8,8], index: 2, kind: output, shape index: {}]
  %s3 = sld [smem:[#allocation0]]
  $region45: #{tpu_custom_call.1} parent=0
    _
  %s5 = ssub.s32 1, %s3
  %s6 = scalar_select 0, %s5, %s3
  $region1: #{tpu_custom_call.1} parent=0
    #allocation2 [shape = 'u8[32768]{0}', space=vmem, size = 0x8000, scoped, tag = 'input window, operand 0']
    #allocation3 [shape = 's32[2]{0}', space=sflag, size = 0x8, scoped, tag = 'scoped memory for tpu_custom_call.1']
    #allocation4 [shape = 's32[2]{0}', space=sflag, size = 0x8, scoped, tag = 'scoped memory for tpu_custom_call.1']
    #allocation5 [shape = 'u8[131072]{0}', space=vmem, size = 0x20000, scoped, tag = 'output window, operand 0']
    %7 = vsyncpa [#allocation3], 0
    %s8 = scalar_lea.sflag [#allocation3], 1
    %9 = vsyncpa %s8, 0
    %10 = vsyncpa [#allocation4], 0
    %s11 = scalar_lea.sflag [#allocation4], 1
    %12 = vsyncpa %s11, 0
    loop: start=0, step=1, limit=4
    $region2: #{tpu_custom_call.1} parent=1 // loop_pre_header
      _
    $region3: #{tpu_custom_call.1} parent=1 // loop_header
      %s14 = sphi 0, %s18
      %p15 = scmp.ge.s32.totalorder %s14, 4
      %s21 = sphi 0, %s33
      %s22 = sphi 0, %s29
      %s23 = sphi 0, %s21
      %s24 = sphi 0, %s22
      %s25 = sphi 0, %s23
      %s26 = sphi 0, %s24
      %s38 = sphi 0, %s40
      %s41 = sphi 0, %s38
      %s42 = sphi 0, %s41
      %s58 = sphi 0, %s42
      %s62 = sphi 0, %s62
      %s64 = sphi 0, %s62
      %s65 = sphi 0, %s64
      %s79 = sphi 0, %s65
      %s87 = sphi 0, %s89
      %s90 = sphi 0, %s87
      %s91 = sphi 0, %s90
      %s107 = sphi 0, %s91
    $region4: #{tpu_custom_call.1} parent=1 // loop_header_branch
      %17 = sbr.rel (%p15) target = $region8
    $region5: #{tpu_custom_call.1} parent=1 // loop_body
      %s19 = ssub.s32 %s14, 1
      %s20 = ssub.s32 %s14, 2
      %s27 = sadd.s32 1, %s22
      %p28 = scmp.ge.s32.totalorder %s27, 1
      %s29 = scalar_select %p28, 0, %s27
      %s30 = sadd.s32 1, %s21
      %s31 = scalar_select %p28, %s30, %s21
      %p32 = scmp.ge.s32.totalorder %s31, 2
      %s33 = scalar_select %p32, 0, %s31
      %s34 = ssub.s32 %s21, %s33
      %s35 = ssub.s32 %s22, %s29
      %s36 = sor.u32 %s34, %s35
      %p37 = scmp.eq.s32.totalorder %s36, 0
      %s39 = sadd.s32 %s38, 1
      %s40 = scalar_select %p37, %s38, %s39
      %p43 = pneg %p37
      %p44 = scmp.eq.s32.totalorder %s14, 1
      %p45 = por %p43, %p44
      %p46 = scmp.ne.s32.totalorder %s38, %s41
      %p47 = scmp.eq.s32.totalorder %s14, 0
      %p48 = por %p46, %p47
      %p49 = scmp.ne.s32.totalorder %s38, %s41
      %p50 = scmp.eq.s32.totalorder %s19, 1
      %p51 = por %p49, %p50
      %p52 = scmp.ne.s32.totalorder %s41, %s42
      %p53 = scmp.eq.s32.totalorder %s19, 0
      %p54 = por %p52, %p53
      %p55 = scmp.ne.s32.totalorder %s41, %s42
      %p56 = scmp.eq.s32.totalorder %s20, 1
      %p57 = por %p55, %p56
      %p59 = scmp.ne.s32.totalorder %s42, %s58
      %p60 = scmp.eq.s32.totalorder %s20, 0
      %p61 = por %p59, %p60
      %s63 = sadd.s32 %s62, 1
      %p66 = scmp.eq.s32.totalorder %s14, 1
      %p67 = scmp.ne.s32.totalorder %s62, %s64
      %p68 = scmp.eq.s32.totalorder %s14, 0
      %p69 = por %p67, %p68
      %p70 = scmp.ne.s32.totalorder %s62, %s64
      %p71 = scmp.eq.s32.totalorder %s19, 1
      %p72 = por %p70, %p71
      %p73 = scmp.ne.s32.totalorder %s64, %s65
      %p74 = scmp.eq.s32.totalorder %s19, 0
      %p75 = por %p73, %p74
      %p76 = scmp.ne.s32.totalorder %s64, %s65
      %p77 = scmp.eq.s32.totalorder %s20, 1
      %p78 = por %p76, %p77
      %p80 = scmp.ne.s32.totalorder %s65, %s79
      %p81 = scmp.eq.s32.totalorder %s20, 0
      %p82 = por %p80, %p81
      %s83 = ssub.s32 %s21, %s33
      %s84 = ssub.s32 %s22, %s29
      %s85 = sor.u32 %s83, %s84
      %p86 = scmp.eq.s32.totalorder %s85, 0
      %s88 = sadd.s32 %s87, 1
      %s89 = scalar_select %p86, %s87, %s88
      %p92 = pneg %p86
      %p93 = scmp.eq.s32.totalorder %s14, 1
      %p94 = por %p92, %p93
      %p95 = scmp.ne.s32.totalorder %s87, %s90
      %p96 = scmp.eq.s32.totalorder %s14, 0
      %p97 = por %p95, %p96
      %p98 = scmp.ne.s32.totalorder %s87, %s90
      %p99 = scmp.eq.s32.totalorder %s19, 1
      %p100 = por %p98, %p99
      %p101 = scmp.ne.s32.totalorder %s90, %s91
      %p102 = scmp.eq.s32.totalorder %s19, 0
      %p103 = por %p101, %p102
      %p104 = scmp.ne.s32.totalorder %s90, %s91
      %p105 = scmp.eq.s32.totalorder %s20, 1
      %p106 = por %p104, %p105
      %p108 = scmp.ne.s32.totalorder %s91, %s107
      %p109 = scmp.eq.s32.totalorder %s20, 0
      %p110 = por %p108, %p109
      %p111 = scmp.le.s32.totalorder 1, %s14
      %p112 = scmp.lt.s32.totalorder %s14, 3
      %p113 = pnand %p111, %p112
      %p114 = pneg %p113
      // Predicated region
      $region9: #{tpu_custom_call.1} parent=5 // pred_check
        _
      $region10: #{tpu_custom_call.1} parent=5 // pred_check_branch
        %116 = sbr.rel (%p113) target = $region12
      $region11: #{tpu_custom_call.1} parent=5 // pred_region
        %s117 = ssub.s32 %s14, 1
        // Predicated region
        $region13: #{tpu_custom_call.1} parent=11 // pred_check
          %p118 = pneg %p75
        $region14: #{tpu_custom_call.1} parent=11 // pred_check_branch
          %120 = sbr.rel (%p118) target = $region16
        $region15: #{tpu_custom_call.1} parent=11 // pred_region
          _
        $region16: #{tpu_custom_call.1} parent=11 // pred_fallthru
          _
      $region12: #{tpu_custom_call.1} parent=5 // pred_fallthru
        _
      %p121 = scmp.lt.s32.totalorder %s14, 2
      // Predicated region
      $region17: #{tpu_custom_call.1} parent=5 // pred_check
        %p122 = pneg %p121
      $region18: #{tpu_custom_call.1} parent=5 // pred_check_branch
        %124 = sbr.rel (%p122) target = $region20
      $region19: #{tpu_custom_call.1} parent=5 // pred_region
        // Predicated region
        $region21: #{tpu_custom_call.1} parent=19 // pred_check
          %p125 = pneg %p48
        $region22: #{tpu_custom_call.1} parent=19 // pred_check_branch
          %127 = sbr.rel (%p125) target = $region24
        $region23: #{tpu_custom_call.1} parent=19 // pred_region
          %s128 = sand.u32 %s38, 1
          %s129 = scalar_lea.sflag [#allocation3], %s128
          %s130 = sand.u32 %s38, 1
          %s131 = smul.addr %s130, 32
          %s132 = scalar_lea.vmem [#allocation2], %s131
          %s133 = smul.u32 4, %s22
          %s135 = ssub.s32 512, 512
          %136 = vsyncadd %s129, %s135
          %s137 = smul.addr %s21, 4
          %s138 = sadd.s32 %s133, %s137
          %s139 = smul.addr %s138, 128
          %s140 = scalar_lea.hbm %s0, %s139
          %s141 = sshll.u32 %s132, 4
          %s142 = int_to_ptr.vmem [resolvable:$true] %s141
          %147 = dma.hbm_to_vmem [thread:$0]  %s140, 512, %s142, %s129, 128, 128, 8
        $region24: #{tpu_custom_call.1} parent=19 // pred_fallthru
          _
      $region20: #{tpu_custom_call.1} parent=5 // pred_fallthru
        _
      %p148 = scmp.le.s32.totalorder 1, %s14
      %p149 = scmp.lt.s32.totalorder %s14, 3
      %p150 = pnand %p148, %p149
      %p151 = pneg %p150
      // Predicated region
      $region25: #{tpu_custom_call.1} parent=5 // pred_check
        _
      $region26: #{tpu_custom_call.1} parent=5 // pred_check_branch
        %153 = sbr.rel (%p150) target = $region28
      $region27: #{tpu_custom_call.1} parent=5 // pred_region
        %s154 = ssub.s32 %s14, 1
        %s155 = sand.u32 %s41, 1
        %s156 = scalar_lea.sflag [#allocation3], %s155
        %s157 = sand.u32 %s41, 1
        %s158 = smul.addr %s157, 32
        %s159 = scalar_lea.vmem [#allocation2], %s158
        // Predicated region
        $region29: #{tpu_custom_call.1} parent=27 // pred_check
          %p160 = pneg %p54
        $region30: #{tpu_custom_call.1} parent=27 // pred_check_branch
          %162 = sbr.rel (%p160) target = $region32
        $region31: #{tpu_custom_call.1} parent=27 // pred_region
          %163 = dma.done %s156, 512
        $region32: #{tpu_custom_call.1} parent=27 // pred_fallthru
          _
        %s164 = sand.u32 %s41, 1
        %s165 = scalar_lea.sflag [#allocation3], %s164
        %s166 = sand.u32 %s41, 1
        %s167 = smul.addr %s166, 32
        %s168 = scalar_lea.vmem [#allocation2], %s167
        %p169 = pneg %p54
        %p170 = pneg %p51
        %p171 = pneg %p75
        %p172 = pneg %p72
        %p173 = pneg %p103
        %p174 = pneg %p100
        %s175 = sand.u32 %s90, 1
        %s176 = scalar_lea.sflag [#allocation4], %s175
        %s177 = sand.u32 %s90, 1
        %s178 = smul.addr %s177, 128
        %s179 = scalar_lea.vmem [#allocation5], %s178
        %s180 = smul.u32 4, %s24
        %s181 = smul.u32 4, %s24
        %v182 = vld [vmem:[%s159] sm:$0xff]
        %v183 = vld [vmem:[%s159 + $0x8] sm:$0xff]
        %v184 = vld [vmem:[%s159 + $0x10] sm:$0xff]
        %v185 = vld [vmem:[%s159 + $0x18] sm:$0xff]
        %v186 = vld [vmem:[%s1] sm:$0xff]
        %v187 = vld [vmem:[%s1 + $0x8] sm:$0xff]
        %vm188 = vcmask 130048
        %v190 = vsel %vm188, %v182, 0
        %v193 = vsel %vm188, %v183, 0
        %v196 = vsel %vm188, %v184, 0
        %v199 = vsel %vm188, %v185, 0
        %201 = vmatprep.subr.mxu0 0.0
        %202 = vmatpush1.msra.mxu0 0.0
        %203 = vmatprep.subr.mxu0 0.0
        %204 = vmatpush1.msra.mxu0 0.0
        %205 = vmatprep.subr.mxu0 0.0
        %206 = vmatpush1.msra.mxu0 0.0
        %207 = vmatprep.subr.mxu0 0.0
        %208 = vmatpush1.msra.mxu0 0.0
        %209 = vmatprep.subr.mxu0 0.0
        %210 = vmatpush1.msra.mxu0 0.0
        %211 = vmatprep.subr.mxu0 0.0
        %212 = vmatpush1.msra.mxu0 0.0
        %213 = vmatprep.subr.mxu0 0.0
        %214 = vmatpush1.msra.mxu0 0.0
        %215 = vmatprep.subr.mxu0 0.0
        %216 = vmatpush1.msra.mxu0 0.0
        %217 = vmatprep.subr.mxu0 0.0
        %218 = vmatpush1.msra.mxu0 0.0
        %219 = vmatprep.subr.mxu0 0.0
        %220 = vmatpush1.msra.mxu0 0.0
        %221 = vmatprep.subr.mxu0 0.0
        %222 = vmatpush1.msra.mxu0 0.0
        %223 = vmatprep.subr.mxu0 0.0
        %224 = vmatpush1.msra.mxu0 0.0
        %225 = vmatprep.subr.mxu0 0.0
        %226 = vmatpush1.msra.mxu0 0.0
        %227 = vmatprep.subr.mxu0 0.0
        %228 = vmatpush1.msra.mxu0 0.0
        %229 = vmatprep.subr.mxu0 0.0
        %v230 = vand.u32 %v187, 4294901760
        %231 = vmatpush1.msra.mxu0 %v230
        %232 = vmatprep.subr.mxu0 0.0
        %v233 = vand.u32 %v186, 4294901760
        %234 = vmatpush1.msra.mxu0 %v233
        %235 = vmatprep.subr.mxu0 0.0
        %236 = vmatpush2.msra.mxu0 0.0
        %237 = vmatprep.subr.mxu0 0.0
        %238 = vmatpush2.msra.mxu0 0.0
        %239 = vmatprep.subr.mxu0 0.0
        %240 = vmatpush2.msra.mxu0 0.0
        %241 = vmatprep.subr.mxu0 0.0
        %242 = vmatpush2.msra.mxu0 0.0
        %243 = vmatprep.subr.mxu0 0.0
        %244 = vmatpush2.msra.mxu0 0.0
        %245 = vmatprep.subr.mxu0 0.0
        %246 = vmatpush2.msra.mxu0 0.0
        %247 = vmatprep.subr.mxu0 0.0
        %248 = vmatpush2.msra.mxu0 0.0
        %249 = vmatprep.subr.mxu0 0.0
        %250 = vmatpush2.msra.mxu0 0.0
        %251 = vmatprep.subr.mxu0 0.0
        %252 = vmatpush2.msra.mxu0 0.0
        %253 = vmatprep.subr.mxu0 0.0
        %254 = vmatpush2.msra.mxu0 0.0
        %255 = vmatprep.subr.mxu0 0.0
        %256 = vmatpush2.msra.mxu0 0.0
        %257 = vmatprep.subr.mxu0 0.0
        %258 = vmatpush2.msra.mxu0 0.0
        %259 = vmatprep.subr.mxu0 0.0
        %260 = vmatpush2.msra.mxu0 0.0
        %261 = vmatprep.subr.mxu0 0.0
        %262 = vmatpush2.msra.mxu0 0.0
        %263 = vmatprep.subr.mxu0 0.0
        %264 = vmatpush2.msra.mxu0 0.0
        %265 = vmatprep.subr.mxu0 0.0
        %266 = vmatpush2.msra.mxu0 0.0
        %267 = vmatprep.mubr.f32.mxu0 0.0
        %v268 = vand.u32 %v190, 4294901760
        %v269 = vsub.f32 %v190, %v268
        %v270 = vand.u32 %v269, 4294901760
        %v271 = vsub.f32 %v269, %v270
        %v272 = vand.u32 %v271, 4294901760
        %273 = vmatmul.mubr.f32.gmra.mxu0 %v272
        %v274 = vpop.f32.mrf.mxu0
        %v275 = vadd.f32 0.0, %v274
        %v276 = vpop.f32.mrf.mxu0
        %277 = vmatprep.mubr.f32.mxu0 0.0
        %v278 = vand.u32 %v193, 4294901760
        %v279 = vsub.f32 %v193, %v278
        %v280 = vand.u32 %v279, 4294901760
        %v281 = vsub.f32 %v279, %v280
        %v282 = vand.u32 %v281, 4294901760
        %283 = vmatmul.mubr.f32.gmra.mxu0 %v282
        %v284 = vpop.f32.mrf.mxu0
        %v285 = vadd.f32 0.0, %v284
        %v286 = vpop.f32.mrf.mxu0
        %287 = vmatprep.mubr.f32.mxu0 0.0
        %v288 = vand.u32 %v196, 4294901760
        %v289 = vsub.f32 %v196, %v288
        %v290 = vand.u32 %v289, 4294901760
        %v291 = vsub.f32 %v289, %v290
        %v292 = vand.u32 %v291, 4294901760
        %293 = vmatmul.mubr.f32.gmra.mxu0 %v292
        %v294 = vpop.f32.mrf.mxu0
        %v295 = vadd.f32 0.0, %v294
        %v296 = vpop.f32.mrf.mxu0
        %297 = vmatprep.mubr.f32.mxu0 0.0
        %v298 = vand.u32 %v199, 4294901760
        %v299 = vsub.f32 %v199, %v298
        %v300 = vand.u32 %v299, 4294901760
        %v301 = vsub.f32 %v299, %v300
        %v302 = vand.u32 %v301, 4294901760
        %303 = vmatmul.mubr.f32.gmra.mxu0 %v302
        %v304 = vpop.f32.mrf.mxu0
        %v305 = vadd.f32 0.0, %v304
        %v306 = vpop.f32.mrf.mxu0
        %307 = vdwg.mxu0
        %308 = vmatprep.subr.mxu0 0.0
        %309 = vmatpush1.msra.mxu0 0.0
        %310 = vmatprep.subr.mxu0 0.0
        %311 = vmatpush1.msra.mxu0 0.0
        %312 = vmatprep.subr.mxu0 0.0
        %313 = vmatpush1.msra.mxu0 0.0
        %314 = vmatprep.subr.mxu0 0.0
        %315 = vmatpush1.msra.mxu0 0.0
        %316 = vmatprep.subr.mxu0 0.0
        %317 = vmatpush1.msra.mxu0 0.0
        %318 = vmatprep.subr.mxu0 0.0
        %319 = vmatpush1.msra.mxu0 0.0
        %320 = vmatprep.subr.mxu0 0.0
        %321 = vmatpush1.msra.mxu0 0.0
        %322 = vmatprep.subr.mxu0 0.0
        %323 = vmatpush1.msra.mxu0 0.0
        %324 = vmatprep.subr.mxu0 0.0
        %325 = vmatpush1.msra.mxu0 0.0
        %326 = vmatprep.subr.mxu0 0.0
        %327 = vmatpush1.msra.mxu0 0.0
        %328 = vmatprep.subr.mxu0 0.0
        %329 = vmatpush1.msra.mxu0 0.0
        %330 = vmatprep.subr.mxu0 0.0
        %331 = vmatpush1.msra.mxu0 0.0
        %332 = vmatprep.subr.mxu0 0.0
        %333 = vmatpush1.msra.mxu0 0.0
        %334 = vmatprep.subr.mxu0 0.0
        %335 = vmatpush1.msra.mxu0 0.0
        %336 = vmatprep.subr.mxu0 0.0
        %v337 = vand.u32 %v187, 4294901760
        %v338 = vsub.f32 %v187, %v337
        %v339 = vand.u32 %v338, 4294901760
        %v340 = vsub.f32 %v338, %v339
        %v341 = vand.u32 %v340, 4294901760
        %342 = vmatpush1.msra.mxu0 %v341
        %343 = vmatprep.subr.mxu0 0.0
        %v344 = vand.u32 %v186, 4294901760
        %v345 = vsub.f32 %v186, %v344
        %v346 = vand.u32 %v345, 4294901760
        %v347 = vsub.f32 %v345, %v346
        %v348 = vand.u32 %v347, 4294901760
        %349 = vmatpush1.msra.mxu0 %v348
        %350 = vmatprep.subr.mxu0 0.0
        %351 = vmatpush2.msra.mxu0 0.0
        %352 = vmatprep.subr.mxu0 0.0
        %353 = vmatpush2.msra.mxu0 0.0
        %354 = vmatprep.subr.mxu0 0.0
        %355 = vmatpush2.msra.mxu0 0.0
        %356 = vmatprep.subr.mxu0 0.0
        %357 = vmatpush2.msra.mxu0 0.0
        %358 = vmatprep.subr.mxu0 0.0
        %359 = vmatpush2.msra.mxu0 0.0
        %360 = vmatprep.subr.mxu0 0.0
        %361 = vmatpush2.msra.mxu0 0.0
        %362 = vmatprep.subr.mxu0 0.0
        %363 = vmatpush2.msra.mxu0 0.0
        %364 = vmatprep.subr.mxu0 0.0
        %365 = vmatpush2.msra.mxu0 0.0
        %366 = vmatprep.subr.mxu0 0.0
        %367 = vmatpush2.msra.mxu0 0.0
        %368 = vmatprep.subr.mxu0 0.0
        %369 = vmatpush2.msra.mxu0 0.0
        %370 = vmatprep.subr.mxu0 0.0
        %371 = vmatpush2.msra.mxu0 0.0
        %372 = vmatprep.subr.mxu0 0.0
        %373 = vmatpush2.msra.mxu0 0.0
        %374 = vmatprep.subr.mxu0 0.0
        %375 = vmatpush2.msra.mxu0 0.0
        %376 = vmatprep.subr.mxu0 0.0
        %377 = vmatpush2.msra.mxu0 0.0
        %378 = vmatprep.subr.mxu0 0.0
        %379 = vmatpush2.msra.mxu0 0.0
        %380 = vmatprep.subr.mxu0 0.0
        %381 = vmatpush2.msra.mxu0 0.0
        %382 = vmatprep.mubr.f32.mxu0 0.0
        %v383 = vand.u32 %v190, 4294901760
        %384 = vmatmul.mubr.f32.gmra.mxu0 %v383
        %v385 = vpop.f32.mrf.mxu0
        %v386 = vadd.f32 %v275, %v385
        %v387 = vpop.f32.mrf.mxu0
        %388 = vmatprep.mubr.f32.mxu0 0.0
        %v389 = vand.u32 %v193, 4294901760
        %390 = vmatmul.mubr.f32.gmra.mxu0 %v389
        %v391 = vpop.f32.mrf.mxu0
        %v392 = vadd.f32 %v285, %v391
        %v393 = vpop.f32.mrf.mxu0
        %394 = vmatprep.mubr.f32.mxu0 0.0
        %v395 = vand.u32 %v196, 4294901760
        %396 = vmatmul.mubr.f32.gmra.mxu0 %v395
        %v397 = vpop.f32.mrf.mxu0
        %v398 = vadd.f32 %v295, %v397
        %v399 = vpop.f32.mrf.mxu0
        %400 = vmatprep.mubr.f32.mxu0 0.0
        %v401 = vand.u32 %v199, 4294901760
        %402 = vmatmul.mubr.f32.gmra.mxu0 %v401
        %v403 = vpop.f32.mrf.mxu0
        %v404 = vadd.f32 %v305, %v403
        %v405 = vpop.f32.mrf.mxu0
        %406 = vdwg.mxu0
        %407 = vmatprep.subr.mxu0 0.0
        %408 = vmatpush1.msra.mxu0 0.0
        %409 = vmatprep.subr.mxu0 0.0
        %410 = vmatpush1.msra.mxu0 0.0
        %411 = vmatprep.subr.mxu0 0.0
        %412 = vmatpush1.msra.mxu0 0.0
        %413 = vmatprep.subr.mxu0 0.0
        %414 = vmatpush1.msra.mxu0 0.0
        %415 = vmatprep.subr.mxu0 0.0
        %416 = vmatpush1.msra.mxu0 0.0
        %417 = vmatprep.subr.mxu0 0.0
        %418 = vmatpush1.msra.mxu0 0.0
        %419 = vmatprep.subr.mxu0 0.0
        %420 = vmatpush1.msra.mxu0 0.0
        %421 = vmatprep.subr.mxu0 0.0
        %422 = vmatpush1.msra.mxu0 0.0
        %423 = vmatprep.subr.mxu0 0.0
        %424 = vmatpush1.msra.mxu0 0.0
        %425 = vmatprep.subr.mxu0 0.0
        %426 = vmatpush1.msra.mxu0 0.0
        %427 = vmatprep.subr.mxu0 0.0
        %428 = vmatpush1.msra.mxu0 0.0
        %429 = vmatprep.subr.mxu0 0.0
        %430 = vmatpush1.msra.mxu0 0.0
        %431 = vmatprep.subr.mxu0 0.0
        %432 = vmatpush1.msra.mxu0 0.0
        %433 = vmatprep.subr.mxu0 0.0
        %434 = vmatpush1.msra.mxu0 0.0
        %435 = vmatprep.subr.mxu0 0.0
        %v436 = vand.u32 %v187, 4294901760
        %v437 = vsub.f32 %v187, %v436
        %438 = vmatpush1.msra.mxu0 %v437
        %439 = vmatprep.subr.mxu0 0.0
        %v440 = vand.u32 %v186, 4294901760
        %v441 = vsub.f32 %v186, %v440
        %442 = vmatpush1.msra.mxu0 %v441
        %443 = vmatprep.subr.mxu0 0.0
        %444 = vmatpush2.msra.mxu0 0.0
        %445 = vmatprep.subr.mxu0 0.0
        %446 = vmatpush2.msra.mxu0 0.0
        %447 = vmatprep.subr.mxu0 0.0
        %448 = vmatpush2.msra.mxu0 0.0
        %449 = vmatprep.subr.mxu0 0.0
        %450 = vmatpush2.msra.mxu0 0.0
        %451 = vmatprep.subr.mxu0 0.0
        %452 = vmatpush2.msra.mxu0 0.0
        %453 = vmatprep.subr.mxu0 0.0
        %454 = vmatpush2.msra.mxu0 0.0
        %455 = vmatprep.subr.mxu0 0.0
        %456 = vmatpush2.msra.mxu0 0.0
        %457 = vmatprep.subr.mxu0 0.0
        %458 = vmatpush2.msra.mxu0 0.0
        %459 = vmatprep.subr.mxu0 0.0
        %460 = vmatpush2.msra.mxu0 0.0
        %461 = vmatprep.subr.mxu0 0.0
        %462 = vmatpush2.msra.mxu0 0.0
        %463 = vmatprep.subr.mxu0 0.0
        %464 = vmatpush2.msra.mxu0 0.0
        %465 = vmatprep.subr.mxu0 0.0
        %466 = vmatpush2.msra.mxu0 0.0
        %467 = vmatprep.subr.mxu0 0.0
        %468 = vmatpush2.msra.mxu0 0.0
        %469 = vmatprep.subr.mxu0 0.0
        %470 = vmatpush2.msra.mxu0 0.0
        %471 = vmatprep.subr.mxu0 0.0
        %472 = vmatpush2.msra.mxu0 0.0
        %473 = vmatprep.subr.mxu0 0.0
        %474 = vmatpush2.msra.mxu0 0.0
        %475 = vmatprep.mubr.f32.mxu0 0.0
        %v476 = vand.u32 %v190, 4294901760
        %v477 = vsub.f32 %v190, %v476
        %478 = vmatmul.mubr.f32.gmra.mxu0 %v477
        %v479 = vpop.f32.mrf.mxu0
        %v480 = vadd.f32 %v386, %v479
        %v481 = vpop.f32.mrf.mxu0
        %482 = vmatprep.mubr.f32.mxu0 0.0
        %v483 = vand.u32 %v193, 4294901760
        %v484 = vsub.f32 %v193, %v483
        %485 = vmatmul.mubr.f32.gmra.mxu0 %v484
        %v486 = vpop.f32.mrf.mxu0
        %v487 = vadd.f32 %v392, %v486
        %v488 = vpop.f32.mrf.mxu0
        %489 = vmatprep.mubr.f32.mxu0 0.0
        %v490 = vand.u32 %v196, 4294901760
        %v491 = vsub.f32 %v196, %v490
        %492 = vmatmul.mubr.f32.gmra.mxu0 %v491
        %v493 = vpop.f32.mrf.mxu0
        %v494 = vadd.f32 %v398, %v493
        %v495 = vpop.f32.mrf.mxu0
        %496 = vmatprep.mubr.f32.mxu0 0.0
        %v497 = vand.u32 %v199, 4294901760
        %v498 = vsub.f32 %v199, %v497
        %499 = vmatmul.mubr.f32.gmra.mxu0 %v498
        %v500 = vpop.f32.mrf.mxu0
        %v501 = vadd.f32 %v404, %v500
        %v502 = vpop.f32.mrf.mxu0
        %503 = vdwg.mxu0
        %504 = vmatprep.subr.mxu0 0.0
        %505 = vmatpush1.msra.mxu0 0.0
        %506 = vmatprep.subr.mxu0 0.0
        %507 = vmatpush1.msra.mxu0 0.0
        %508 = vmatprep.subr.mxu0 0.0
        %509 = vmatpush1.msra.mxu0 0.0
        %510 = vmatprep.subr.mxu0 0.0
        %511 = vmatpush1.msra.mxu0 0.0
        %512 = vmatprep.subr.mxu0 0.0
        %513 = vmatpush1.msra.mxu0 0.0
        %514 = vmatprep.subr.mxu0 0.0
        %515 = vmatpush1.msra.mxu0 0.0
        %516 = vmatprep.subr.mxu0 0.0
        %517 = vmatpush1.msra.mxu0 0.0
        %518 = vmatprep.subr.mxu0 0.0
        %519 = vmatpush1.msra.mxu0 0.0
        %520 = vmatprep.subr.mxu0 0.0
        %521 = vmatpush1.msra.mxu0 0.0
        %522 = vmatprep.subr.mxu0 0.0
        %523 = vmatpush1.msra.mxu0 0.0
        %524 = vmatprep.subr.mxu0 0.0
        %525 = vmatpush1.msra.mxu0 0.0
        %526 = vmatprep.subr.mxu0 0.0
        %527 = vmatpush1.msra.mxu0 0.0
        %528 = vmatprep.subr.mxu0 0.0
        %529 = vmatpush1.msra.mxu0 0.0
        %530 = vmatprep.subr.mxu0 0.0
        %531 = vmatpush1.msra.mxu0 0.0
        %532 = vmatprep.subr.mxu0 0.0
        %v533 = vand.u32 %v187, 4294901760
        %534 = vmatpush1.msra.mxu0 %v533
        %535 = vmatprep.subr.mxu0 0.0
        %v536 = vand.u32 %v186, 4294901760
        %537 = vmatpush1.msra.mxu0 %v536
        %538 = vmatprep.subr.mxu0 0.0
        %539 = vmatpush2.msra.mxu0 0.0
        %540 = vmatprep.subr.mxu0 0.0
        %541 = vmatpush2.msra.mxu0 0.0
        %542 = vmatprep.subr.mxu0 0.0
        %543 = vmatpush2.msra.mxu0 0.0
        %544 = vmatprep.subr.mxu0 0.0
        %545 = vmatpush2.msra.mxu0 0.0
        %546 = vmatprep.subr.mxu0 0.0
        %547 = vmatpush2.msra.mxu0 0.0
        %548 = vmatprep.subr.mxu0 0.0
        %549 = vmatpush2.msra.mxu0 0.0
        %550 = vmatprep.subr.mxu0 0.0
        %551 = vmatpush2.msra.mxu0 0.0
        %552 = vmatprep.subr.mxu0 0.0
        %553 = vmatpush2.msra.mxu0 0.0
        %554 = vmatprep.subr.mxu0 0.0
        %555 = vmatpush2.msra.mxu0 0.0
        %556 = vmatprep.subr.mxu0 0.0
        %557 = vmatpush2.msra.mxu0 0.0
        %558 = vmatprep.subr.mxu0 0.0
        %559 = vmatpush2.msra.mxu0 0.0
        %560 = vmatprep.subr.mxu0 0.0
        %561 = vmatpush2.msra.mxu0 0.0
        %562 = vmatprep.subr.mxu0 0.0
        %563 = vmatpush2.msra.mxu0 0.0
        %564 = vmatprep.subr.mxu0 0.0
        %565 = vmatpush2.msra.mxu0 0.0
        %566 = vmatprep.subr.mxu0 0.0
        %567 = vmatpush2.msra.mxu0 0.0
        %568 = vmatprep.subr.mxu0 0.0
        %569 = vmatpush2.msra.mxu0 0.0
        %570 = vmatprep.mubr.f32.mxu0 0.0
        %v571 = vand.u32 %v190, 4294901760
        %v572 = vsub.f32 %v190, %v571
        %v573 = vand.u32 %v572, 4294901760
        %574 = vmatmul.mubr.f32.gmra.mxu0 %v573
        %v575 = vpop.f32.mrf.mxu0
        %v576 = vadd.f32 %v480, %v575
        %v577 = vpop.f32.mrf.mxu0
        %578 = vmatprep.mubr.f32.mxu0 0.0
        %v579 = vand.u32 %v193, 4294901760
        %v580 = vsub.f32 %v193, %v579
        %v581 = vand.u32 %v580, 4294901760
        %582 = vmatmul.mubr.f32.gmra.mxu0 %v581
        %v583 = vpop.f32.mrf.mxu0
        %v584 = vadd.f32 %v487, %v583
        %v585 = vpop.f32.mrf.mxu0
        %586 = vmatprep.mubr.f32.mxu0 0.0
        %v587 = vand.u32 %v196, 4294901760
        %v588 = vsub.f32 %v196, %v587
        %v589 = vand.u32 %v588, 4294901760
        %590 = vmatmul.mubr.f32.gmra.mxu0 %v589
        %v591 = vpop.f32.mrf.mxu0
        %v592 = vadd.f32 %v494, %v591
        %v593 = vpop.f32.mrf.mxu0
        %594 = vmatprep.mubr.f32.mxu0 0.0
        %v595 = vand.u32 %v199, 4294901760
        %v596 = vsub.f32 %v199, %v595
        %v597 = vand.u32 %v596, 4294901760
        %598 = vmatmul.mubr.f32.gmra.mxu0 %v597
        %v599 = vpop.f32.mrf.mxu0
        %v600 = vadd.f32 %v501, %v599
        %v601 = vpop.f32.mrf.mxu0
        %602 = vdwg.mxu0
        %603 = vmatprep.subr.mxu0 0.0
        %604 = vmatpush1.msra.mxu0 0.0
        %605 = vmatprep.subr.mxu0 0.0
        %606 = vmatpush1.msra.mxu0 0.0
        %607 = vmatprep.subr.mxu0 0.0
        %608 = vmatpush1.msra.mxu0 0.0
        %609 = vmatprep.subr.mxu0 0.0
        %610 = vmatpush1.msra.mxu0 0.0
        %611 = vmatprep.subr.mxu0 0.0
        %612 = vmatpush1.msra.mxu0 0.0
        %613 = vmatprep.subr.mxu0 0.0
        %614 = vmatpush1.msra.mxu0 0.0
        %615 = vmatprep.subr.mxu0 0.0
        %616 = vmatpush1.msra.mxu0 0.0
        %617 = vmatprep.subr.mxu0 0.0
        %618 = vmatpush1.msra.mxu0 0.0
        %619 = vmatprep.subr.mxu0 0.0
        %620 = vmatpush1.msra.mxu0 0.0
        %621 = vmatprep.subr.mxu0 0.0
        %622 = vmatpush1.msra.mxu0 0.0
        %623 = vmatprep.subr.mxu0 0.0
        %624 = vmatpush1.msra.mxu0 0.0
        %625 = vmatprep.subr.mxu0 0.0
        %626 = vmatpush1.msra.mxu0 0.0
        %627 = vmatprep.subr.mxu0 0.0
        %628 = vmatpush1.msra.mxu0 0.0
        %629 = vmatprep.subr.mxu0 0.0
        %630 = vmatpush1.msra.mxu0 0.0
        %631 = vmatprep.subr.mxu0 0.0
        %v632 = vand.u32 %v187, 4294901760
        %v633 = vsub.f32 %v187, %v632
        %v634 = vand.u32 %v633, 4294901760
        %635 = vmatpush1.msra.mxu0 %v634
        %636 = vmatprep.subr.mxu0 0.0
        %v637 = vand.u32 %v186, 4294901760
        %v638 = vsub.f32 %v186, %v637
        %v639 = vand.u32 %v638, 4294901760
        %640 = vmatpush1.msra.mxu0 %v639
        %641 = vmatprep.subr.mxu0 0.0
        %642 = vmatpush2.msra.mxu0 0.0
        %643 = vmatprep.subr.mxu0 0.0
        %644 = vmatpush2.msra.mxu0 0.0
        %645 = vmatprep.subr.mxu0 0.0
        %646 = vmatpush2.msra.mxu0 0.0
        %647 = vmatprep.subr.mxu0 0.0
        %648 = vmatpush2.msra.mxu0 0.0
        %649 = vmatprep.subr.mxu0 0.0
        %650 = vmatpush2.msra.mxu0 0.0
        %651 = vmatprep.subr.mxu0 0.0
        %652 = vmatpush2.msra.mxu0 0.0
        %653 = vmatprep.subr.mxu0 0.0
        %654 = vmatpush2.msra.mxu0 0.0
        %655 = vmatprep.subr.mxu0 0.0
        %656 = vmatpush2.msra.mxu0 0.0
        %657 = vmatprep.subr.mxu0 0.0
        %658 = vmatpush2.msra.mxu0 0.0
        %659 = vmatprep.subr.mxu0 0.0
        %660 = vmatpush2.msra.mxu0 0.0
        %661 = vmatprep.subr.mxu0 0.0
        %662 = vmatpush2.msra.mxu0 0.0
        %663 = vmatprep.subr.mxu0 0.0
        %664 = vmatpush2.msra.mxu0 0.0
        %665 = vmatprep.subr.mxu0 0.0
        %666 = vmatpush2.msra.mxu0 0.0
        %667 = vmatprep.subr.mxu0 0.0
        %668 = vmatpush2.msra.mxu0 0.0
        %669 = vmatprep.subr.mxu0 0.0
        %670 = vmatpush2.msra.mxu0 0.0
        %671 = vmatprep.subr.mxu0 0.0
        %672 = vmatpush2.msra.mxu0 0.0
        %673 = vmatprep.mubr.f32.mxu0 0.0
        %v674 = vand.u32 %v190, 4294901760
        %675 = vmatmul.mubr.f32.gmra.mxu0 %v674
        %v676 = vpop.f32.mrf.mxu0
        %v677 = vadd.f32 %v576, %v676
        %v678 = vpop.f32.mrf.mxu0
        %679 = vmatprep.mubr.f32.mxu0 0.0
        %v680 = vand.u32 %v193, 4294901760
        %681 = vmatmul.mubr.f32.gmra.mxu0 %v680
        %v682 = vpop.f32.mrf.mxu0
        %v683 = vadd.f32 %v584, %v682
        %v684 = vpop.f32.mrf.mxu0
        %685 = vmatprep.mubr.f32.mxu0 0.0
        %v686 = vand.u32 %v196, 4294901760
        %687 = vmatmul.mubr.f32.gmra.mxu0 %v686
        %v688 = vpop.f32.mrf.mxu0
        %v689 = vadd.f32 %v592, %v688
        %v690 = vpop.f32.mrf.mxu0
        %691 = vmatprep.mubr.f32.mxu0 0.0
        %v692 = vand.u32 %v199, 4294901760
        %693 = vmatmul.mubr.f32.gmra.mxu0 %v692
        %v694 = vpop.f32.mrf.mxu0
        %v695 = vadd.f32 %v600, %v694
        %v696 = vpop.f32.mrf.mxu0
        %697 = vdwg.mxu0
        %698 = vmatprep.subr.mxu0 0.0
        %699 = vmatpush1.msra.mxu0 0.0
        %700 = vmatprep.subr.mxu0 0.0
        %701 = vmatpush1.msra.mxu0 0.0
        %702 = vmatprep.subr.mxu0 0.0
        %703 = vmatpush1.msra.mxu0 0.0
        %704 = vmatprep.subr.mxu0 0.0
        %705 = vmatpush1.msra.mxu0 0.0
        %706 = vmatprep.subr.mxu0 0.0
        %707 = vmatpush1.msra.mxu0 0.0
        %708 = vmatprep.subr.mxu0 0.0
        %709 = vmatpush1.msra.mxu0 0.0
        %710 = vmatprep.subr.mxu0 0.0
        %711 = vmatpush1.msra.mxu0 0.0
        %712 = vmatprep.subr.mxu0 0.0
        %713 = vmatpush1.msra.mxu0 0.0
        %714 = vmatprep.subr.mxu0 0.0
        %715 = vmatpush1.msra.mxu0 0.0
        %716 = vmatprep.subr.mxu0 0.0
        %717 = vmatpush1.msra.mxu0 0.0
        %718 = vmatprep.subr.mxu0 0.0
        %719 = vmatpush1.msra.mxu0 0.0
        %720 = vmatprep.subr.mxu0 0.0
        %721 = vmatpush1.msra.mxu0 0.0
        %722 = vmatprep.subr.mxu0 0.0
        %723 = vmatpush1.msra.mxu0 0.0
        %724 = vmatprep.subr.mxu0 0.0
        %725 = vmatpush1.msra.mxu0 0.0
        %726 = vmatprep.subr.mxu0 0.0
        %v727 = vand.u32 %v187, 4294901760
        %728 = vmatpush1.msra.mxu0 %v727
        %729 = vmatprep.subr.mxu0 0.0
        %v730 = vand.u32 %v186, 4294901760
        %731 = vmatpush1.msra.mxu0 %v730
        %732 = vmatprep.subr.mxu0 0.0
        %733 = vmatpush2.msra.mxu0 0.0
        %734 = vmatprep.subr.mxu0 0.0
        %735 = vmatpush2.msra.mxu0 0.0
        %736 = vmatprep.subr.mxu0 0.0
        %737 = vmatpush2.msra.mxu0 0.0
        %738 = vmatprep.subr.mxu0 0.0
        %739 = vmatpush2.msra.mxu0 0.0
        %740 = vmatprep.subr.mxu0 0.0
        %741 = vmatpush2.msra.mxu0 0.0
        %742 = vmatprep.subr.mxu0 0.0
        %743 = vmatpush2.msra.mxu0 0.0
        %744 = vmatprep.subr.mxu0 0.0
        %745 = vmatpush2.msra.mxu0 0.0
        %746 = vmatprep.subr.mxu0 0.0
        %747 = vmatpush2.msra.mxu0 0.0
        %748 = vmatprep.subr.mxu0 0.0
        %749 = vmatpush2.msra.mxu0 0.0
        %750 = vmatprep.subr.mxu0 0.0
        %751 = vmatpush2.msra.mxu0 0.0
        %752 = vmatprep.subr.mxu0 0.0
        %753 = vmatpush2.msra.mxu0 0.0
        %754 = vmatprep.subr.mxu0 0.0
        %755 = vmatpush2.msra.mxu0 0.0
        %756 = vmatprep.subr.mxu0 0.0
        %757 = vmatpush2.msra.mxu0 0.0
        %758 = vmatprep.subr.mxu0 0.0
        %759 = vmatpush2.msra.mxu0 0.0
        %760 = vmatprep.subr.mxu0 0.0
        %761 = vmatpush2.msra.mxu0 0.0
        %762 = vmatprep.subr.mxu0 0.0
        %763 = vmatpush2.msra.mxu0 0.0
        %764 = vmatprep.mubr.f32.mxu0 0.0
        %v765 = vand.u32 %v190, 4294901760
        %766 = vmatmul.mubr.f32.gmra.mxu0 %v765
        %v767 = vpop.f32.mrf.mxu0
        %v768 = vadd.f32 %v677, %v767
        %v769 = vpop.f32.mrf.mxu0
        %770 = vmatprep.mubr.f32.mxu0 0.0
        %v771 = vand.u32 %v193, 4294901760
        %772 = vmatmul.mubr.f32.gmra.mxu0 %v771
        %v773 = vpop.f32.mrf.mxu0
        %v774 = vadd.f32 %v683, %v773
        %v775 = vpop.f32.mrf.mxu0
        %776 = vmatprep.mubr.f32.mxu0 0.0
        %v777 = vand.u32 %v196, 4294901760
        %778 = vmatmul.mubr.f32.gmra.mxu0 %v777
        %v779 = vpop.f32.mrf.mxu0
        %v780 = vadd.f32 %v689, %v779
        %v781 = vpop.f32.mrf.mxu0
        %782 = vmatprep.mubr.f32.mxu0 0.0
        %v783 = vand.u32 %v199, 4294901760
        %784 = vmatmul.mubr.f32.gmra.mxu0 %v783
        %v785 = vpop.f32.mrf.mxu0
        %v786 = vadd.f32 %v695, %v785
        %v787 = vpop.f32.mrf.mxu0
        %788 = vdwg.mxu0
        %vm789 = vcmask 64512
        %790 = vst.msk [vmem:[%s179] sm:$0xff] %vm789, %v768
        %791 = vst.msk [vmem:[%s179 + $0x20] sm:$0xff] %vm789, %v774
        %792 = vst.msk [vmem:[%s179 + $0x40] sm:$0xff] %vm789, %v780
        %793 = vst.msk [vmem:[%s179 + $0x60] sm:$0xff] %vm789, %v786
        %s794 = scalar_lea.vmem %s1, 16
        %v795 = vld [vmem:[%s794] sm:$0xff]
        %v796 = vld [vmem:[%s794 + $0x8] sm:$0xff]
        %797 = vmatprep.subr.mxu0 0.0
        %798 = vmatpush1.msra.mxu0 0.0
        %799 = vmatprep.subr.mxu0 0.0
        %800 = vmatpush1.msra.mxu0 0.0
        %801 = vmatprep.subr.mxu0 0.0
        %802 = vmatpush1.msra.mxu0 0.0
        %803 = vmatprep.subr.mxu0 0.0
        %804 = vmatpush1.msra.mxu0 0.0
        %805 = vmatprep.subr.mxu0 0.0
        %806 = vmatpush1.msra.mxu0 0.0
        %807 = vmatprep.subr.mxu0 0.0
        %808 = vmatpush1.msra.mxu0 0.0
        %809 = vmatprep.subr.mxu0 0.0
        %810 = vmatpush1.msra.mxu0 0.0
        %811 = vmatprep.subr.mxu0 0.0
        %812 = vmatpush1.msra.mxu0 0.0
        %813 = vmatprep.subr.mxu0 0.0
        %814 = vmatpush1.msra.mxu0 0.0
        %815 = vmatprep.subr.mxu0 0.0
        %816 = vmatpush1.msra.mxu0 0.0
        %817 = vmatprep.subr.mxu0 0.0
        %818 = vmatpush1.msra.mxu0 0.0
        %819 = vmatprep.subr.mxu0 0.0
        %820 = vmatpush1.msra.mxu0 0.0
        %821 = vmatprep.subr.mxu0 0.0
        %822 = vmatpush1.msra.mxu0 0.0
        %823 = vmatprep.subr.mxu0 0.0
        %824 = vmatpush1.msra.mxu0 0.0
        %825 = vmatprep.subr.mxu0 0.0
        %v826 = vand.u32 %v796, 4294901760
        %827 = vmatpush1.msra.mxu0 %v826
        %828 = vmatprep.subr.mxu0 0.0
        %v829 = vand.u32 %v795, 4294901760
        %830 = vmatpush1.msra.mxu0 %v829
        %831 = vmatprep.subr.mxu0 0.0
        %832 = vmatpush2.msra.mxu0 0.0
        %833 = vmatprep.subr.mxu0 0.0
        %834 = vmatpush2.msra.mxu0 0.0
        %835 = vmatprep.subr.mxu0 0.0
        %836 = vmatpush2.msra.mxu0 0.0
        %837 = vmatprep.subr.mxu0 0.0
        %838 = vmatpush2.msra.mxu0 0.0
        %839 = vmatprep.subr.mxu0 0.0
        %840 = vmatpush2.msra.mxu0 0.0
        %841 = vmatprep.subr.mxu0 0.0
        %842 = vmatpush2.msra.mxu0 0.0
        %843 = vmatprep.subr.mxu0 0.0
        %844 = vmatpush2.msra.mxu0 0.0
        %845 = vmatprep.subr.mxu0 0.0
        %846 = vmatpush2.msra.mxu0 0.0
        %847 = vmatprep.subr.mxu0 0.0
        %848 = vmatpush2.msra.mxu0 0.0
        %849 = vmatprep.subr.mxu0 0.0
        %850 = vmatpush2.msra.mxu0 0.0
        %851 = vmatprep.subr.mxu0 0.0
        %852 = vmatpush2.msra.mxu0 0.0
        %853 = vmatprep.subr.mxu0 0.0
        %854 = vmatpush2.msra.mxu0 0.0
        %855 = vmatprep.subr.mxu0 0.0
        %856 = vmatpush2.msra.mxu0 0.0
        %857 = vmatprep.subr.mxu0 0.0
        %858 = vmatpush2.msra.mxu0 0.0
        %859 = vmatprep.subr.mxu0 0.0
        %860 = vmatpush2.msra.mxu0 0.0
        %861 = vmatprep.subr.mxu0 0.0
        %862 = vmatpush2.msra.mxu0 0.0
        %863 = vmatprep.mubr.f32.mxu0 0.0
        %v864 = vand.u32 %v190, 4294901760
        %v865 = vsub.f32 %v190, %v864
        %v866 = vand.u32 %v865, 4294901760
        %v867 = vsub.f32 %v865, %v866
        %v868 = vand.u32 %v867, 4294901760
        %869 = vmatmul.mubr.f32.gmra.mxu0 %v868
        %v870 = vpop.f32.mrf.mxu0
        %v871 = vadd.f32 0.0, %v870
        %v872 = vpop.f32.mrf.mxu0
        %873 = vmatprep.mubr.f32.mxu0 0.0
        %v874 = vand.u32 %v193, 4294901760
        %v875 = vsub.f32 %v193, %v874
        %v876 = vand.u32 %v875, 4294901760
        %v877 = vsub.f32 %v875, %v876
        %v878 = vand.u32 %v877, 4294901760
        %879 = vmatmul.mubr.f32.gmra.mxu0 %v878
        %v880 = vpop.f32.mrf.mxu0
        %v881 = vadd.f32 0.0, %v880
        %v882 = vpop.f32.mrf.mxu0
        %883 = vmatprep.mubr.f32.mxu0 0.0
        %v884 = vand.u32 %v196, 4294901760
        %v885 = vsub.f32 %v196, %v884
        %v886 = vand.u32 %v885, 4294901760
        %v887 = vsub.f32 %v885, %v886
        %v888 = vand.u32 %v887, 4294901760
        %889 = vmatmul.mubr.f32.gmra.mxu0 %v888
        %v890 = vpop.f32.mrf.mxu0
        %v891 = vadd.f32 0.0, %v890
        %v892 = vpop.f32.mrf.mxu0
        %893 = vmatprep.mubr.f32.mxu0 0.0
        %v894 = vand.u32 %v199, 4294901760
        %v895 = vsub.f32 %v199, %v894
        %v896 = vand.u32 %v895, 4294901760
        %v897 = vsub.f32 %v895, %v896
        %v898 = vand.u32 %v897, 4294901760
        %899 = vmatmul.mubr.f32.gmra.mxu0 %v898
        %v900 = vpop.f32.mrf.mxu0
        %v901 = vadd.f32 0.0, %v900
        %v902 = vpop.f32.mrf.mxu0
        %903 = vdwg.mxu0
        %904 = vmatprep.subr.mxu0 0.0
        %905 = vmatpush1.msra.mxu0 0.0
        %906 = vmatprep.subr.mxu0 0.0
        %907 = vmatpush1.msra.mxu0 0.0
        %908 = vmatprep.subr.mxu0 0.0
        %909 = vmatpush1.msra.mxu0 0.0
        %910 = vmatprep.subr.mxu0 0.0
        %911 = vmatpush1.msra.mxu0 0.0
        %912 = vmatprep.subr.mxu0 0.0
        %913 = vmatpush1.msra.mxu0 0.0
        %914 = vmatprep.subr.mxu0 0.0
        %915 = vmatpush1.msra.mxu0 0.0
        %916 = vmatprep.subr.mxu0 0.0
        %917 = vmatpush1.msra.mxu0 0.0
        %918 = vmatprep.subr.mxu0 0.0
        %919 = vmatpush1.msra.mxu0 0.0
        %920 = vmatprep.subr.mxu0 0.0
        %921 = vmatpush1.msra.mxu0 0.0
        %922 = vmatprep.subr.mxu0 0.0
        %923 = vmatpush1.msra.mxu0 0.0
        %924 = vmatprep.subr.mxu0 0.0
        %925 = vmatpush1.msra.mxu0 0.0
        %926 = vmatprep.subr.mxu0 0.0
        %927 = vmatpush1.msra.mxu0 0.0
        %928 = vmatprep.subr.mxu0 0.0
        %929 = vmatpush1.msra.mxu0 0.0
        %930 = vmatprep.subr.mxu0 0.0
        %931 = vmatpush1.msra.mxu0 0.0
        %932 = vmatprep.subr.mxu0 0.0
        %v933 = vand.u32 %v796, 4294901760
        %v934 = vsub.f32 %v796, %v933
        %v935 = vand.u32 %v934, 4294901760
        %v936 = vsub.f32 %v934, %v935
        %v937 = vand.u32 %v936, 4294901760
        %938 = vmatpush1.msra.mxu0 %v937
        %939 = vmatprep.subr.mxu0 0.0
        %v940 = vand.u32 %v795, 4294901760
        %v941 = vsub.f32 %v795, %v940
        %v942 = vand.u32 %v941, 4294901760
        %v943 = vsub.f32 %v941, %v942
        %v944 = vand.u32 %v943, 4294901760
        %945 = vmatpush1.msra.mxu0 %v944
        %946 = vmatprep.subr.mxu0 0.0
        %947 = vmatpush2.msra.mxu0 0.0
        %948 = vmatprep.subr.mxu0 0.0
        %949 = vmatpush2.msra.mxu0 0.0
        %950 = vmatprep.subr.mxu0 0.0
        %951 = vmatpush2.msra.mxu0 0.0
        %952 = vmatprep.subr.mxu0 0.0
        %953 = vmatpush2.msra.mxu0 0.0
        %954 = vmatprep.subr.mxu0 0.0
        %955 = vmatpush2.msra.mxu0 0.0
        %956 = vmatprep.subr.mxu0 0.0
        %957 = vmatpush2.msra.mxu0 0.0
        %958 = vmatprep.subr.mxu0 0.0
        %959 = vmatpush2.msra.mxu0 0.0
        %960 = vmatprep.subr.mxu0 0.0
        %961 = vmatpush2.msra.mxu0 0.0
        %962 = vmatprep.subr.mxu0 0.0
        %963 = vmatpush2.msra.mxu0 0.0
        %964 = vmatprep.subr.mxu0 0.0
        %965 = vmatpush2.msra.mxu0 0.0
        %966 = vmatprep.subr.mxu0 0.0
        %967 = vmatpush2.msra.mxu0 0.0
        %968 = vmatprep.subr.mxu0 0.0
        %969 = vmatpush2.msra.mxu0 0.0
        %970 = vmatprep.subr.mxu0 0.0
        %971 = vmatpush2.msra.mxu0 0.0
        %972 = vmatprep.subr.mxu0 0.0
        %973 = vmatpush2.msra.mxu0 0.0
        %974 = vmatprep.subr.mxu0 0.0
        %975 = vmatpush2.msra.mxu0 0.0
        %976 = vmatprep.subr.mxu0 0.0
        %977 = vmatpush2.msra.mxu0 0.0
        %978 = vmatprep.mubr.f32.mxu0 0.0
        %v979 = vand.u32 %v190, 4294901760
        %980 = vmatmul.mubr.f32.gmra.mxu0 %v979
        %v981 = vpop.f32.mrf.mxu0
        %v982 = vadd.f32 %v871, %v981
        %v983 = vpop.f32.mrf.mxu0
        %984 = vmatprep.mubr.f32.mxu0 0.0
        %v985 = vand.u32 %v193, 4294901760
        %986 = vmatmul.mubr.f32.gmra.mxu0 %v985
        %v987 = vpop.f32.mrf.mxu0
        %v988 = vadd.f32 %v881, %v987
        %v989 = vpop.f32.mrf.mxu0
        %990 = vmatprep.mubr.f32.mxu0 0.0
        %v991 = vand.u32 %v196, 4294901760
        %992 = vmatmul.mubr.f32.gmra.mxu0 %v991
        %v993 = vpop.f32.mrf.mxu0
        %v994 = vadd.f32 %v891, %v993
        %v995 = vpop.f32.mrf.mxu0
        %996 = vmatprep.mubr.f32.mxu0 0.0
        %v997 = vand.u32 %v199, 4294901760
        %998 = vmatmul.mubr.f32.gmra.mxu0 %v997
        %v999 = vpop.f32.mrf.mxu0
        %v1000 = vadd.f32 %v901, %v999
        %v1001 = vpop.f32.mrf.mxu0
        %1002 = vdwg.mxu0
        %1003 = vmatprep.subr.mxu0 0.0
        %1004 = vmatpush1.msra.mxu0 0.0
        %1005 = vmatprep.subr.mxu0 0.0
        %1006 = vmatpush1.msra.mxu0 0.0
        %1007 = vmatprep.subr.mxu0 0.0
        %1008 = vmatpush1.msra.mxu0 0.0
        %1009 = vmatprep.subr.mxu0 0.0
        %1010 = vmatpush1.msra.mxu0 0.0
        %1011 = vmatprep.subr.mxu0 0.0
        %1012 = vmatpush1.msra.mxu0 0.0
        %1013 = vmatprep.subr.mxu0 0.0
        %1014 = vmatpush1.msra.mxu0 0.0
        %1015 = vmatprep.subr.mxu0 0.0
        %1016 = vmatpush1.msra.mxu0 0.0
        %1017 = vmatprep.subr.mxu0 0.0
        %1018 = vmatpush1.msra.mxu0 0.0
        %1019 = vmatprep.subr.mxu0 0.0
        %1020 = vmatpush1.msra.mxu0 0.0
        %1021 = vmatprep.subr.mxu0 0.0
        %1022 = vmatpush1.msra.mxu0 0.0
        %1023 = vmatprep.subr.mxu0 0.0
        %1024 = vmatpush1.msra.mxu0 0.0
        %1025 = vmatprep.subr.mxu0 0.0
        %1026 = vmatpush1.msra.mxu0 0.0
        %1027 = vmatprep.subr.mxu0 0.0
        %1028 = vmatpush1.msra.mxu0 0.0
        %1029 = vmatprep.subr.mxu0 0.0
        %1030 = vmatpush1.msra.mxu0 0.0
        %1031 = vmatprep.subr.mxu0 0.0
        %v1032 = vand.u32 %v796, 4294901760
        %v1033 = vsub.f32 %v796, %v1032
        %1034 = vmatpush1.msra.mxu0 %v1033
        %1035 = vmatprep.subr.mxu0 0.0
        %v1036 = vand.u32 %v795, 4294901760
        %v1037 = vsub.f32 %v795, %v1036
        %1038 = vmatpush1.msra.mxu0 %v1037
        %1039 = vmatprep.subr.mxu0 0.0
        %1040 = vmatpush2.msra.mxu0 0.0
        %1041 = vmatprep.subr.mxu0 0.0
        %1042 = vmatpush2.msra.mxu0 0.0
        %1043 = vmatprep.subr.mxu0 0.0
        %1044 = vmatpush2.msra.mxu0 0.0
        %1045 = vmatprep.subr.mxu0 0.0
        %1046 = vmatpush2.msra.mxu0 0.0
        %1047 = vmatprep.subr.mxu0 0.0
        %1048 = vmatpush2.msra.mxu0 0.0
        %1049 = vmatprep.subr.mxu0 0.0
        %1050 = vmatpush2.msra.mxu0 0.0
        %1051 = vmatprep.subr.mxu0 0.0
        %1052 = vmatpush2.msra.mxu0 0.0
        %1053 = vmatprep.subr.mxu0 0.0
        %1054 = vmatpush2.msra.mxu0 0.0
        %1055 = vmatprep.subr.mxu0 0.0
        %1056 = vmatpush2.msra.mxu0 0.0
        %1057 = vmatprep.subr.mxu0 0.0
        %1058 = vmatpush2.msra.mxu0 0.0
        %1059 = vmatprep.subr.mxu0 0.0
        %1060 = vmatpush2.msra.mxu0 0.0
        %1061 = vmatprep.subr.mxu0 0.0
        %1062 = vmatpush2.msra.mxu0 0.0
        %1063 = vmatprep.subr.mxu0 0.0
        %1064 = vmatpush2.msra.mxu0 0.0
        %1065 = vmatprep.subr.mxu0 0.0
        %1066 = vmatpush2.msra.mxu0 0.0
        %1067 = vmatprep.subr.mxu0 0.0
        %1068 = vmatpush2.msra.mxu0 0.0
        %1069 = vmatprep.subr.mxu0 0.0
        %1070 = vmatpush2.msra.mxu0 0.0
        %1071 = vmatprep.mubr.f32.mxu0 0.0
        %v1072 = vand.u32 %v190, 4294901760
        %v1073 = vsub.f32 %v190, %v1072
        %1074 = vmatmul.mubr.f32.gmra.mxu0 %v1073
        %v1075 = vpop.f32.mrf.mxu0
        %v1076 = vadd.f32 %v982, %v1075
        %v1077 = vpop.f32.mrf.mxu0
        %1078 = vmatprep.mubr.f32.mxu0 0.0
        %v1079 = vand.u32 %v193, 4294901760
        %v1080 = vsub.f32 %v193, %v1079
        %1081 = vmatmul.mubr.f32.gmra.mxu0 %v1080
        %v1082 = vpop.f32.mrf.mxu0
        %v1083 = vadd.f32 %v988, %v1082
        %v1084 = vpop.f32.mrf.mxu0
        %1085 = vmatprep.mubr.f32.mxu0 0.0
        %v1086 = vand.u32 %v196, 4294901760
        %v1087 = vsub.f32 %v196, %v1086
        %1088 = vmatmul.mubr.f32.gmra.mxu0 %v1087
        %v1089 = vpop.f32.mrf.mxu0
        %v1090 = vadd.f32 %v994, %v1089
        %v1091 = vpop.f32.mrf.mxu0
        %1092 = vmatprep.mubr.f32.mxu0 0.0
        %v1093 = vand.u32 %v199, 4294901760
        %v1094 = vsub.f32 %v199, %v1093
        %1095 = vmatmul.mubr.f32.gmra.mxu0 %v1094
        %v1096 = vpop.f32.mrf.mxu0
        %v1097 = vadd.f32 %v1000, %v1096
        %v1098 = vpop.f32.mrf.mxu0
        %1099 = vdwg.mxu0
        %1100 = vmatprep.subr.mxu0 0.0
        %1101 = vmatpush1.msra.mxu0 0.0
        %1102 = vmatprep.subr.mxu0 0.0
        %1103 = vmatpush1.msra.mxu0 0.0
        %1104 = vmatprep.subr.mxu0 0.0
        %1105 = vmatpush1.msra.mxu0 0.0
        %1106 = vmatprep.subr.mxu0 0.0
        %1107 = vmatpush1.msra.mxu0 0.0
        %1108 = vmatprep.subr.mxu0 0.0
        %1109 = vmatpush1.msra.mxu0 0.0
        %1110 = vmatprep.subr.mxu0 0.0
        %1111 = vmatpush1.msra.mxu0 0.0
        %1112 = vmatprep.subr.mxu0 0.0
        %1113 = vmatpush1.msra.mxu0 0.0
        %1114 = vmatprep.subr.mxu0 0.0
        %1115 = vmatpush1.msra.mxu0 0.0
        %1116 = vmatprep.subr.mxu0 0.0
        %1117 = vmatpush1.msra.mxu0 0.0
        %1118 = vmatprep.subr.mxu0 0.0
        %1119 = vmatpush1.msra.mxu0 0.0
        %1120 = vmatprep.subr.mxu0 0.0
        %1121 = vmatpush1.msra.mxu0 0.0
        %1122 = vmatprep.subr.mxu0 0.0
        %1123 = vmatpush1.msra.mxu0 0.0
        %1124 = vmatprep.subr.mxu0 0.0
        %1125 = vmatpush1.msra.mxu0 0.0
        %1126 = vmatprep.subr.mxu0 0.0
        %1127 = vmatpush1.msra.mxu0 0.0
        %1128 = vmatprep.subr.mxu0 0.0
        %v1129 = vand.u32 %v796, 4294901760
        %1130 = vmatpush1.msra.mxu0 %v1129
        %1131 = vmatprep.subr.mxu0 0.0
        %v1132 = vand.u32 %v795, 4294901760
        %1133 = vmatpush1.msra.mxu0 %v1132
        %1134 = vmatprep.subr.mxu0 0.0
        %1135 = vmatpush2.msra.mxu0 0.0
        %1136 = vmatprep.subr.mxu0 0.0
        %1137 = vmatpush2.msra.mxu0 0.0
        %1138 = vmatprep.subr.mxu0 0.0
        %1139 = vmatpush2.msra.mxu0 0.0
        %1140 = vmatprep.subr.mxu0 0.0
        %1141 = vmatpush2.msra.mxu0 0.0
        %1142 = vmatprep.subr.mxu0 0.0
        %1143 = vmatpush2.msra.mxu0 0.0
        %1144 = vmatprep.subr.mxu0 0.0
        %1145 = vmatpush2.msra.mxu0 0.0
        %1146 = vmatprep.subr.mxu0 0.0
        %1147 = vmatpush2.msra.mxu0 0.0
        %1148 = vmatprep.subr.mxu0 0.0
        %1149 = vmatpush2.msra.mxu0 0.0
        %1150 = vmatprep.subr.mxu0 0.0
        %1151 = vmatpush2.msra.mxu0 0.0
        %1152 = vmatprep.subr.mxu0 0.0
        %1153 = vmatpush2.msra.mxu0 0.0
        %1154 = vmatprep.subr.mxu0 0.0
        %1155 = vmatpush2.msra.mxu0 0.0
        %1156 = vmatprep.subr.mxu0 0.0
        %1157 = vmatpush2.msra.mxu0 0.0
        %1158 = vmatprep.subr.mxu0 0.0
        %1159 = vmatpush2.msra.mxu0 0.0
        %1160 = vmatprep.subr.mxu0 0.0
        %1161 = vmatpush2.msra.mxu0 0.0
        %1162 = vmatprep.subr.mxu0 0.0
        %1163 = vmatpush2.msra.mxu0 0.0
        %1164 = vmatprep.subr.mxu0 0.0
        %1165 = vmatpush2.msra.mxu0 0.0
        %1166 = vmatprep.mubr.f32.mxu0 0.0
        %v1167 = vand.u32 %v190, 4294901760
        %v1168 = vsub.f32 %v190, %v1167
        %v1169 = vand.u32 %v1168, 4294901760
        %1170 = vmatmul.mubr.f32.gmra.mxu0 %v1169
        %v1171 = vpop.f32.mrf.mxu0
        %v1172 = vadd.f32 %v1076, %v1171
        %v1173 = vpop.f32.mrf.mxu0
        %1174 = vmatprep.mubr.f32.mxu0 0.0
        %v1175 = vand.u32 %v193, 4294901760
        %v1176 = vsub.f32 %v193, %v1175
        %v1177 = vand.u32 %v1176, 4294901760
        %1178 = vmatmul.mubr.f32.gmra.mxu0 %v1177
        %v1179 = vpop.f32.mrf.mxu0
        %v1180 = vadd.f32 %v1083, %v1179
        %v1181 = vpop.f32.mrf.mxu0
        %1182 = vmatprep.mubr.f32.mxu0 0.0
        %v1183 = vand.u32 %v196, 4294901760
        %v1184 = vsub.f32 %v196, %v1183
        %v1185 = vand.u32 %v1184, 4294901760
        %1186 = vmatmul.mubr.f32.gmra.mxu0 %v1185
        %v1187 = vpop.f32.mrf.mxu0
        %v1188 = vadd.f32 %v1090, %v1187
        %v1189 = vpop.f32.mrf.mxu0
        %1190 = vmatprep.mubr.f32.mxu0 0.0
        %v1191 = vand.u32 %v199, 4294901760
        %v1192 = vsub.f32 %v199, %v1191
        %v1193 = vand.u32 %v1192, 4294901760
        %1194 = vmatmul.mubr.f32.gmra.mxu0 %v1193
        %v1195 = vpop.f32.mrf.mxu0
        %v1196 = vadd.f32 %v1097, %v1195
        %v1197 = vpop.f32.mrf.mxu0
        %1198 = vdwg.mxu0
        %1199 = vmatprep.subr.mxu0 0.0
        %1200 = vmatpush1.msra.mxu0 0.0
        %1201 = vmatprep.subr.mxu0 0.0
        %1202 = vmatpush1.msra.mxu0 0.0
        %1203 = vmatprep.subr.mxu0 0.0
        %1204 = vmatpush1.msra.mxu0 0.0
        %1205 = vmatprep.subr.mxu0 0.0
        %1206 = vmatpush1.msra.mxu0 0.0
        %1207 = vmatprep.subr.mxu0 0.0
        %1208 = vmatpush1.msra.mxu0 0.0
        %1209 = vmatprep.subr.mxu0 0.0
        %1210 = vmatpush1.msra.mxu0 0.0
        %1211 = vmatprep.subr.mxu0 0.0
        %1212 = vmatpush1.msra.mxu0 0.0
        %1213 = vmatprep.subr.mxu0 0.0
        %1214 = vmatpush1.msra.mxu0 0.0
        %1215 = vmatprep.subr.mxu0 0.0
        %1216 = vmatpush1.msra.mxu0 0.0
        %1217 = vmatprep.subr.mxu0 0.0
        %1218 = vmatpush1.msra.mxu0 0.0
        %1219 = vmatprep.subr.mxu0 0.0
        %1220 = vmatpush1.msra.mxu0 0.0
        %1221 = vmatprep.subr.mxu0 0.0
        %1222 = vmatpush1.msra.mxu0 0.0
        %1223 = vmatprep.subr.mxu0 0.0
        %1224 = vmatpush1.msra.mxu0 0.0
        %1225 = vmatprep.subr.mxu0 0.0
        %1226 = vmatpush1.msra.mxu0 0.0
        %1227 = vmatprep.subr.mxu0 0.0
        %v1228 = vand.u32 %v796, 4294901760
        %v1229 = vsub.f32 %v796, %v1228
        %v1230 = vand.u32 %v1229, 4294901760
        %1231 = vmatpush1.msra.mxu0 %v1230
        %1232 = vmatprep.subr.mxu0 0.0
        %v1233 = vand.u32 %v795, 4294901760
        %v1234 = vsub.f32 %v795, %v1233
        %v1235 = vand.u32 %v1234, 4294901760
        %1236 = vmatpush1.msra.mxu0 %v1235
        %1237 = vmatprep.subr.mxu0 0.0
        %1238 = vmatpush2.msra.mxu0 0.0
        %1239 = vmatprep.subr.mxu0 0.0
        %1240 = vmatpush2.msra.mxu0 0.0
        %1241 = vmatprep.subr.mxu0 0.0
        %1242 = vmatpush2.msra.mxu0 0.0
        %1243 = vmatprep.subr.mxu0 0.0
        %1244 = vmatpush2.msra.mxu0 0.0
        %1245 = vmatprep.subr.mxu0 0.0
        %1246 = vmatpush2.msra.mxu0 0.0
        %1247 = vmatprep.subr.mxu0 0.0
        %1248 = vmatpush2.msra.mxu0 0.0
        %1249 = vmatprep.subr.mxu0 0.0
        %1250 = vmatpush2.msra.mxu0 0.0
        %1251 = vmatprep.subr.mxu0 0.0
        %1252 = vmatpush2.msra.mxu0 0.0
        %1253 = vmatprep.subr.mxu0 0.0
        %1254 = vmatpush2.msra.mxu0 0.0
        %1255 = vmatprep.subr.mxu0 0.0
        %1256 = vmatpush2.msra.mxu0 0.0
        %1257 = vmatprep.subr.mxu0 0.0
        %1258 = vmatpush2.msra.mxu0 0.0
        %1259 = vmatprep.subr.mxu0 0.0
        %1260 = vmatpush2.msra.mxu0 0.0
        %1261 = vmatprep.subr.mxu0 0.0
        %1262 = vmatpush2.msra.mxu0 0.0
        %1263 = vmatprep.subr.mxu0 0.0
        %1264 = vmatpush2.msra.mxu0 0.0
        %1265 = vmatprep.subr.mxu0 0.0
        %1266 = vmatpush2.msra.mxu0 0.0
        %1267 = vmatprep.subr.mxu0 0.0
        %1268 = vmatpush2.msra.mxu0 0.0
        %1269 = vmatprep.mubr.f32.mxu0 0.0
        %v1270 = vand.u32 %v190, 4294901760
        %1271 = vmatmul.mubr.f32.gmra.mxu0 %v1270
        %v1272 = vpop.f32.mrf.mxu0
        %v1273 = vadd.f32 %v1172, %v1272
        %v1274 = vpop.f32.mrf.mxu0
        %1275 = vmatprep.mubr.f32.mxu0 0.0
        %v1276 = vand.u32 %v193, 4294901760
        %1277 = vmatmul.mubr.f32.gmra.mxu0 %v1276
        %v1278 = vpop.f32.mrf.mxu0
        %v1279 = vadd.f32 %v1180, %v1278
        %v1280 = vpop.f32.mrf.mxu0
        %1281 = vmatprep.mubr.f32.mxu0 0.0
        %v1282 = vand.u32 %v196, 4294901760
        %1283 = vmatmul.mubr.f32.gmra.mxu0 %v1282
        %v1284 = vpop.f32.mrf.mxu0
        %v1285 = vadd.f32 %v1188, %v1284
        %v1286 = vpop.f32.mrf.mxu0
        %1287 = vmatprep.mubr.f32.mxu0 0.0
        %v1288 = vand.u32 %v199, 4294901760
        %1289 = vmatmul.mubr.f32.gmra.mxu0 %v1288
        %v1290 = vpop.f32.mrf.mxu0
        %v1291 = vadd.f32 %v1196, %v1290
        %v1292 = vpop.f32.mrf.mxu0
        %1293 = vdwg.mxu0
        %1294 = vmatprep.subr.mxu0 0.0
        %1295 = vmatpush1.msra.mxu0 0.0
        %1296 = vmatprep.subr.mxu0 0.0
        %1297 = vmatpush1.msra.mxu0 0.0
        %1298 = vmatprep.subr.mxu0 0.0
        %1299 = vmatpush1.msra.mxu0 0.0
        %1300 = vmatprep.subr.mxu0 0.0
        %1301 = vmatpush1.msra.mxu0 0.0
        %1302 = vmatprep.subr.mxu0 0.0
        %1303 = vmatpush1.msra.mxu0 0.0
        %1304 = vmatprep.subr.mxu0 0.0
        %1305 = vmatpush1.msra.mxu0 0.0
        %1306 = vmatprep.subr.mxu0 0.0
        %1307 = vmatpush1.msra.mxu0 0.0
        %1308 = vmatprep.subr.mxu0 0.0
        %1309 = vmatpush1.msra.mxu0 0.0
        %1310 = vmatprep.subr.mxu0 0.0
        %1311 = vmatpush1.msra.mxu0 0.0
        %1312 = vmatprep.subr.mxu0 0.0
        %1313 = vmatpush1.msra.mxu0 0.0
        %1314 = vmatprep.subr.mxu0 0.0
        %1315 = vmatpush1.msra.mxu0 0.0
        %1316 = vmatprep.subr.mxu0 0.0
        %1317 = vmatpush1.msra.mxu0 0.0
        %1318 = vmatprep.subr.mxu0 0.0
        %1319 = vmatpush1.msra.mxu0 0.0
        %1320 = vmatprep.subr.mxu0 0.0
        %1321 = vmatpush1.msra.mxu0 0.0
        %1322 = vmatprep.subr.mxu0 0.0
        %v1323 = vand.u32 %v796, 4294901760
        %1324 = vmatpush1.msra.mxu0 %v1323
        %1325 = vmatprep.subr.mxu0 0.0
        %v1326 = vand.u32 %v795, 4294901760
        %1327 = vmatpush1.msra.mxu0 %v1326
        %1328 = vmatprep.subr.mxu0 0.0
        %1329 = vmatpush2.msra.mxu0 0.0
        %1330 = vmatprep.subr.mxu0 0.0
        %1331 = vmatpush2.msra.mxu0 0.0
        %1332 = vmatprep.subr.mxu0 0.0
        %1333 = vmatpush2.msra.mxu0 0.0
        %1334 = vmatprep.subr.mxu0 0.0
        %1335 = vmatpush2.msra.mxu0 0.0
        %1336 = vmatprep.subr.mxu0 0.0
        %1337 = vmatpush2.msra.mxu0 0.0
        %1338 = vmatprep.subr.mxu0 0.0
        %1339 = vmatpush2.msra.mxu0 0.0
        %1340 = vmatprep.subr.mxu0 0.0
        %1341 = vmatpush2.msra.mxu0 0.0
        %1342 = vmatprep.subr.mxu0 0.0
        %1343 = vmatpush2.msra.mxu0 0.0
        %1344 = vmatprep.subr.mxu0 0.0
        %1345 = vmatpush2.msra.mxu0 0.0
        %1346 = vmatprep.subr.mxu0 0.0
        %1347 = vmatpush2.msra.mxu0 0.0
        %1348 = vmatprep.subr.mxu0 0.0
        %1349 = vmatpush2.msra.mxu0 0.0
        %1350 = vmatprep.subr.mxu0 0.0
        %1351 = vmatpush2.msra.mxu0 0.0
        %1352 = vmatprep.subr.mxu0 0.0
        %1353 = vmatpush2.msra.mxu0 0.0
        %1354 = vmatprep.subr.mxu0 0.0
        %1355 = vmatpush2.msra.mxu0 0.0
        %1356 = vmatprep.subr.mxu0 0.0
        %1357 = vmatpush2.msra.mxu0 0.0
        %1358 = vmatprep.subr.mxu0 0.0
        %1359 = vmatpush2.msra.mxu0 0.0
        %1360 = vmatprep.mubr.f32.mxu0 0.0
        %v1361 = vand.u32 %v190, 4294901760
        %1362 = vmatmul.mubr.f32.gmra.mxu0 %v1361
        %v1363 = vpop.f32.mrf.mxu0
        %v1364 = vadd.f32 %v1273, %v1363
        %v1365 = vpop.f32.mrf.mxu0
        %1366 = vmatprep.mubr.f32.mxu0 0.0
        %v1367 = vand.u32 %v193, 4294901760
        %1368 = vmatmul.mubr.f32.gmra.mxu0 %v1367
        %v1369 = vpop.f32.mrf.mxu0
        %v1370 = vadd.f32 %v1279, %v1369
        %v1371 = vpop.f32.mrf.mxu0
        %1372 = vmatprep.mubr.f32.mxu0 0.0
        %v1373 = vand.u32 %v196, 4294901760
        %1374 = vmatmul.mubr.f32.gmra.mxu0 %v1373
        %v1375 = vpop.f32.mrf.mxu0
        %v1376 = vadd.f32 %v1285, %v1375
        %v1377 = vpop.f32.mrf.mxu0
        %1378 = vmatprep.mubr.f32.mxu0 0.0
        %v1379 = vand.u32 %v199, 4294901760
        %1380 = vmatmul.mubr.f32.gmra.mxu0 %v1379
        %v1381 = vpop.f32.mrf.mxu0
        %v1382 = vadd.f32 %v1291, %v1381
        %v1383 = vpop.f32.mrf.mxu0
        %1384 = vdwg.mxu0
        %s1385 = scalar_lea.vmem %s179, 8 [#allocation5]
        %1386 = vst.msk [vmem:[%s1385] sm:$0xff] %vm789, %v1364
        %1387 = vst.msk [vmem:[%s1385 + $0x20] sm:$0xff] %vm789, %v1370
        %1388 = vst.msk [vmem:[%s1385 + $0x40] sm:$0xff] %vm789, %v1376
        %1389 = vst.msk [vmem:[%s1385 + $0x60] sm:$0xff] %vm789, %v1382
        %v1390 = vld [vmem:[%s159] sm:$0xff]
        %v1391 = vld [vmem:[%s159 + $0x8] sm:$0xff]
        %v1392 = vld [vmem:[%s159 + $0x10] sm:$0xff]
        %v1393 = vld [vmem:[%s159 + $0x18] sm:$0xff]
        %v1394 = vld [vmem:[%s1] sm:$0xff]
        %v1395 = vld [vmem:[%s1 + $0x8] sm:$0xff]
        %1400 = vrot.lane.b32.xlu0 %v1390, 112
        %v1401 = vpop.permute.xlu0 %1400
        %1402 = vrot.lane.b32.xlu0 %v1391, 112
        %v1403 = vpop.permute.xlu0 %1402
        %1404 = vrot.lane.b32.xlu0 %v1392, 112
        %v1405 = vpop.permute.xlu0 %1404
        %1406 = vrot.lane.b32.xlu0 %v1393, 112
        %v1407 = vpop.permute.xlu0 %1406
        %v1408 = vsel %vm188, %v1401, 0
        %v1410 = vsel %vm188, %v1403, 0
        %v1412 = vsel %vm188, %v1405, 0
        %v1414 = vsel %vm188, %v1407, 0
        %1416 = vmatprep.subr.mxu0 0.0
        %1417 = vmatpush1.msra.mxu0 0.0
        %1418 = vmatprep.subr.mxu0 0.0
        %1419 = vmatpush1.msra.mxu0 0.0
        %1420 = vmatprep.subr.mxu0 0.0
        %1421 = vmatpush1.msra.mxu0 0.0
        %1422 = vmatprep.subr.mxu0 0.0
        %1423 = vmatpush1.msra.mxu0 0.0
        %1424 = vmatprep.subr.mxu0 0.0
        %1425 = vmatpush1.msra.mxu0 0.0
        %1426 = vmatprep.subr.mxu0 0.0
        %1427 = vmatpush1.msra.mxu0 0.0
        %1428 = vmatprep.subr.mxu0 0.0
        %1429 = vmatpush1.msra.mxu0 0.0
        %1430 = vmatprep.subr.mxu0 0.0
        %1431 = vmatpush1.msra.mxu0 0.0
        %1432 = vmatprep.subr.mxu0 0.0
        %1433 = vmatpush1.msra.mxu0 0.0
        %1434 = vmatprep.subr.mxu0 0.0
        %1435 = vmatpush1.msra.mxu0 0.0
        %1436 = vmatprep.subr.mxu0 0.0
        %1437 = vmatpush1.msra.mxu0 0.0
        %1438 = vmatprep.subr.mxu0 0.0
        %1439 = vmatpush1.msra.mxu0 0.0
        %1440 = vmatprep.subr.mxu0 0.0
        %1441 = vmatpush1.msra.mxu0 0.0
        %1442 = vmatprep.subr.mxu0 0.0
        %1443 = vmatpush1.msra.mxu0 0.0
        %1444 = vmatprep.subr.mxu0 0.0
        %v1445 = vand.u32 %v1395, 4294901760
        %1446 = vmatpush1.msra.mxu0 %v1445
        %1447 = vmatprep.subr.mxu0 0.0
        %v1448 = vand.u32 %v1394, 4294901760
        %1449 = vmatpush1.msra.mxu0 %v1448
        %1450 = vmatprep.subr.mxu0 0.0
        %1451 = vmatpush2.msra.mxu0 0.0
        %1452 = vmatprep.subr.mxu0 0.0
        %1453 = vmatpush2.msra.mxu0 0.0
        %1454 = vmatprep.subr.mxu0 0.0
        %1455 = vmatpush2.msra.mxu0 0.0
        %1456 = vmatprep.subr.mxu0 0.0
        %1457 = vmatpush2.msra.mxu0 0.0
        %1458 = vmatprep.subr.mxu0 0.0
        %1459 = vmatpush2.msra.mxu0 0.0
        %1460 = vmatprep.subr.mxu0 0.0
        %1461 = vmatpush2.msra.mxu0 0.0
        %1462 = vmatprep.subr.mxu0 0.0
        %1463 = vmatpush2.msra.mxu0 0.0
        %1464 = vmatprep.subr.mxu0 0.0
        %1465 = vmatpush2.msra.mxu0 0.0
        %1466 = vmatprep.subr.mxu0 0.0
        %1467 = vmatpush2.msra.mxu0 0.0
        %1468 = vmatprep.subr.mxu0 0.0
        %1469 = vmatpush2.msra.mxu0 0.0
        %1470 = vmatprep.subr.mxu0 0.0
        %1471 = vmatpush2.msra.mxu0 0.0
        %1472 = vmatprep.subr.mxu0 0.0
        %1473 = vmatpush2.msra.mxu0 0.0
        %1474 = vmatprep.subr.mxu0 0.0
        %1475 = vmatpush2.msra.mxu0 0.0
        %1476 = vmatprep.subr.mxu0 0.0
        %1477 = vmatpush2.msra.mxu0 0.0
        %1478 = vmatprep.subr.mxu0 0.0
        %1479 = vmatpush2.msra.mxu0 0.0
        %1480 = vmatprep.subr.mxu0 0.0
        %1481 = vmatpush2.msra.mxu0 0.0
        %1482 = vmatprep.mubr.f32.mxu0 0.0
        %v1483 = vand.u32 %v1408, 4294901760
        %v1484 = vsub.f32 %v1408, %v1483
        %v1485 = vand.u32 %v1484, 4294901760
        %v1486 = vsub.f32 %v1484, %v1485
        %v1487 = vand.u32 %v1486, 4294901760
        %1488 = vmatmul.mubr.f32.gmra.mxu0 %v1487
        %v1489 = vpop.f32.mrf.mxu0
        %v1490 = vadd.f32 0.0, %v1489
        %v1491 = vpop.f32.mrf.mxu0
        %1492 = vmatprep.mubr.f32.mxu0 0.0
        %v1493 = vand.u32 %v1410, 4294901760
        %v1494 = vsub.f32 %v1410, %v1493
        %v1495 = vand.u32 %v1494, 4294901760
        %v1496 = vsub.f32 %v1494, %v1495
        %v1497 = vand.u32 %v1496, 4294901760
        %1498 = vmatmul.mubr.f32.gmra.mxu0 %v1497
        %v1499 = vpop.f32.mrf.mxu0
        %v1500 = vadd.f32 0.0, %v1499
        %v1501 = vpop.f32.mrf.mxu0
        %1502 = vmatprep.mubr.f32.mxu0 0.0
        %v1503 = vand.u32 %v1412, 4294901760
        %v1504 = vsub.f32 %v1412, %v1503
        %v1505 = vand.u32 %v1504, 4294901760
        %v1506 = vsub.f32 %v1504, %v1505
        %v1507 = vand.u32 %v1506, 4294901760
        %1508 = vmatmul.mubr.f32.gmra.mxu0 %v1507
        %v1509 = vpop.f32.mrf.mxu0
        %v1510 = vadd.f32 0.0, %v1509
        %v1511 = vpop.f32.mrf.mxu0
        %1512 = vmatprep.mubr.f32.mxu0 0.0
        %v1513 = vand.u32 %v1414, 4294901760
        %v1514 = vsub.f32 %v1414, %v1513
        %v1515 = vand.u32 %v1514, 4294901760
        %v1516 = vsub.f32 %v1514, %v1515
        %v1517 = vand.u32 %v1516, 4294901760
        %1518 = vmatmul.mubr.f32.gmra.mxu0 %v1517
        %v1519 = vpop.f32.mrf.mxu0
        %v1520 = vadd.f32 0.0, %v1519
        %v1521 = vpop.f32.mrf.mxu0
        %1522 = vdwg.mxu0
        %1523 = vmatprep.subr.mxu0 0.0
        %1524 = vmatpush1.msra.mxu0 0.0
        %1525 = vmatprep.subr.mxu0 0.0
        %1526 = vmatpush1.msra.mxu0 0.0
        %1527 = vmatprep.subr.mxu0 0.0
        %1528 = vmatpush1.msra.mxu0 0.0
        %1529 = vmatprep.subr.mxu0 0.0
        %1530 = vmatpush1.msra.mxu0 0.0
        %1531 = vmatprep.subr.mxu0 0.0
        %1532 = vmatpush1.msra.mxu0 0.0
        %1533 = vmatprep.subr.mxu0 0.0
        %1534 = vmatpush1.msra.mxu0 0.0
        %1535 = vmatprep.subr.mxu0 0.0
        %1536 = vmatpush1.msra.mxu0 0.0
        %1537 = vmatprep.subr.mxu0 0.0
        %1538 = vmatpush1.msra.mxu0 0.0
        %1539 = vmatprep.subr.mxu0 0.0
        %1540 = vmatpush1.msra.mxu0 0.0
        %1541 = vmatprep.subr.mxu0 0.0
        %1542 = vmatpush1.msra.mxu0 0.0
        %1543 = vmatprep.subr.mxu0 0.0
        %1544 = vmatpush1.msra.mxu0 0.0
        %1545 = vmatprep.subr.mxu0 0.0
        %1546 = vmatpush1.msra.mxu0 0.0
        %1547 = vmatprep.subr.mxu0 0.0
        %1548 = vmatpush1.msra.mxu0 0.0
        %1549 = vmatprep.subr.mxu0 0.0
        %1550 = vmatpush1.msra.mxu0 0.0
        %1551 = vmatprep.subr.mxu0 0.0
        %v1552 = vand.u32 %v1395, 4294901760
        %v1553 = vsub.f32 %v1395, %v1552
        %v1554 = vand.u32 %v1553, 4294901760
        %v1555 = vsub.f32 %v1553, %v1554
        %v1556 = vand.u32 %v1555, 4294901760
        %1557 = vmatpush1.msra.mxu0 %v1556
        %1558 = vmatprep.subr.mxu0 0.0
        %v1559 = vand.u32 %v1394, 4294901760
        %v1560 = vsub.f32 %v1394, %v1559
        %v1561 = vand.u32 %v1560, 4294901760
        %v1562 = vsub.f32 %v1560, %v1561
        %v1563 = vand.u32 %v1562, 4294901760
        %1564 = vmatpush1.msra.mxu0 %v1563
        %1565 = vmatprep.subr.mxu0 0.0
        %1566 = vmatpush2.msra.mxu0 0.0
        %1567 = vmatprep.subr.mxu0 0.0
        %1568 = vmatpush2.msra.mxu0 0.0
        %1569 = vmatprep.subr.mxu0 0.0
        %1570 = vmatpush2.msra.mxu0 0.0
        %1571 = vmatprep.subr.mxu0 0.0
        %1572 = vmatpush2.msra.mxu0 0.0
        %1573 = vmatprep.subr.mxu0 0.0
        %1574 = vmatpush2.msra.mxu0 0.0
        %1575 = vmatprep.subr.mxu0 0.0
        %1576 = vmatpush2.msra.mxu0 0.0
        %1577 = vmatprep.subr.mxu0 0.0
        %1578 = vmatpush2.msra.mxu0 0.0
        %1579 = vmatprep.subr.mxu0 0.0
        %1580 = vmatpush2.msra.mxu0 0.0
        %1581 = vmatprep.subr.mxu0 0.0
        %1582 = vmatpush2.msra.mxu0 0.0
        %1583 = vmatprep.subr.mxu0 0.0
        %1584 = vmatpush2.msra.mxu0 0.0
        %1585 = vmatprep.subr.mxu0 0.0
        %1586 = vmatpush2.msra.mxu0 0.0
        %1587 = vmatprep.subr.mxu0 0.0
        %1588 = vmatpush2.msra.mxu0 0.0
        %1589 = vmatprep.subr.mxu0 0.0
        %1590 = vmatpush2.msra.mxu0 0.0
        %1591 = vmatprep.subr.mxu0 0.0
        %1592 = vmatpush2.msra.mxu0 0.0
        %1593 = vmatprep.subr.mxu0 0.0
        %1594 = vmatpush2.msra.mxu0 0.0
        %1595 = vmatprep.subr.mxu0 0.0
        %1596 = vmatpush2.msra.mxu0 0.0
        %1597 = vmatprep.mubr.f32.mxu0 0.0
        %v1598 = vand.u32 %v1408, 4294901760
        %1599 = vmatmul.mubr.f32.gmra.mxu0 %v1598
        %v1600 = vpop.f32.mrf.mxu0
        %v1601 = vadd.f32 %v1490, %v1600
        %v1602 = vpop.f32.mrf.mxu0
        %1603 = vmatprep.mubr.f32.mxu0 0.0
        %v1604 = vand.u32 %v1410, 4294901760
        %1605 = vmatmul.mubr.f32.gmra.mxu0 %v1604
        %v1606 = vpop.f32.mrf.mxu0
        %v1607 = vadd.f32 %v1500, %v1606
        %v1608 = vpop.f32.mrf.mxu0
        %1609 = vmatprep.mubr.f32.mxu0 0.0
        %v1610 = vand.u32 %v1412, 4294901760
        %1611 = vmatmul.mubr.f32.gmra.mxu0 %v1610
        %v1612 = vpop.f32.mrf.mxu0
        %v1613 = vadd.f32 %v1510, %v1612
        %v1614 = vpop.f32.mrf.mxu0
        %1615 = vmatprep.mubr.f32.mxu0 0.0
        %v1616 = vand.u32 %v1414, 4294901760
        %1617 = vmatmul.mubr.f32.gmra.mxu0 %v1616
        %v1618 = vpop.f32.mrf.mxu0
        %v1619 = vadd.f32 %v1520, %v1618
        %v1620 = vpop.f32.mrf.mxu0
        %1621 = vdwg.mxu0
        %1622 = vmatprep.subr.mxu0 0.0
        %1623 = vmatpush1.msra.mxu0 0.0
        %1624 = vmatprep.subr.mxu0 0.0
        %1625 = vmatpush1.msra.mxu0 0.0
        %1626 = vmatprep.subr.mxu0 0.0
        %1627 = vmatpush1.msra.mxu0 0.0
        %1628 = vmatprep.subr.mxu0 0.0
        %1629 = vmatpush1.msra.mxu0 0.0
        %1630 = vmatprep.subr.mxu0 0.0
        %1631 = vmatpush1.msra.mxu0 0.0
        %1632 = vmatprep.subr.mxu0 0.0
        %1633 = vmatpush1.msra.mxu0 0.0
        %1634 = vmatprep.subr.mxu0 0.0
        %1635 = vmatpush1.msra.mxu0 0.0
        %1636 = vmatprep.subr.mxu0 0.0
        %1637 = vmatpush1.msra.mxu0 0.0
        %1638 = vmatprep.subr.mxu0 0.0
        %1639 = vmatpush1.msra.mxu0 0.0
        %1640 = vmatprep.subr.mxu0 0.0
        %1641 = vmatpush1.msra.mxu0 0.0
        %1642 = vmatprep.subr.mxu0 0.0
        %1643 = vmatpush1.msra.mxu0 0.0
        %1644 = vmatprep.subr.mxu0 0.0
        %1645 = vmatpush1.msra.mxu0 0.0
        %1646 = vmatprep.subr.mxu0 0.0
        %1647 = vmatpush1.msra.mxu0 0.0
        %1648 = vmatprep.subr.mxu0 0.0
        %1649 = vmatpush1.msra.mxu0 0.0
        %1650 = vmatprep.subr.mxu0 0.0
        %v1651 = vand.u32 %v1395, 4294901760
        %v1652 = vsub.f32 %v1395, %v1651
        %1653 = vmatpush1.msra.mxu0 %v1652
        %1654 = vmatprep.subr.mxu0 0.0
        %v1655 = vand.u32 %v1394, 4294901760
        %v1656 = vsub.f32 %v1394, %v1655
        %1657 = vmatpush1.msra.mxu0 %v1656
        %1658 = vmatprep.subr.mxu0 0.0
        %1659 = vmatpush2.msra.mxu0 0.0
        %1660 = vmatprep.subr.mxu0 0.0
        %1661 = vmatpush2.msra.mxu0 0.0
        %1662 = vmatprep.subr.mxu0 0.0
        %1663 = vmatpush2.msra.mxu0 0.0
        %1664 = vmatprep.subr.mxu0 0.0
        %1665 = vmatpush2.msra.mxu0 0.0
        %1666 = vmatprep.subr.mxu0 0.0
        %1667 = vmatpush2.msra.mxu0 0.0
        %1668 = vmatprep.subr.mxu0 0.0
        %1669 = vmatpush2.msra.mxu0 0.0
        %1670 = vmatprep.subr.mxu0 0.0
        %1671 = vmatpush2.msra.mxu0 0.0
        %1672 = vmatprep.subr.mxu0 0.0
        %1673 = vmatpush2.msra.mxu0 0.0
        %1674 = vmatprep.subr.mxu0 0.0
        %1675 = vmatpush2.msra.mxu0 0.0
        %1676 = vmatprep.subr.mxu0 0.0
        %1677 = vmatpush2.msra.mxu0 0.0
        %1678 = vmatprep.subr.mxu0 0.0
        %1679 = vmatpush2.msra.mxu0 0.0
        %1680 = vmatprep.subr.mxu0 0.0
        %1681 = vmatpush2.msra.mxu0 0.0
        %1682 = vmatprep.subr.mxu0 0.0
        %1683 = vmatpush2.msra.mxu0 0.0
        %1684 = vmatprep.subr.mxu0 0.0
        %1685 = vmatpush2.msra.mxu0 0.0
        %1686 = vmatprep.subr.mxu0 0.0
        %1687 = vmatpush2.msra.mxu0 0.0
        %1688 = vmatprep.subr.mxu0 0.0
        %1689 = vmatpush2.msra.mxu0 0.0
        %1690 = vmatprep.mubr.f32.mxu0 0.0
        %v1691 = vand.u32 %v1408, 4294901760
        %v1692 = vsub.f32 %v1408, %v1691
        %1693 = vmatmul.mubr.f32.gmra.mxu0 %v1692
        %v1694 = vpop.f32.mrf.mxu0
        %v1695 = vadd.f32 %v1601, %v1694
        %v1696 = vpop.f32.mrf.mxu0
        %1697 = vmatprep.mubr.f32.mxu0 0.0
        %v1698 = vand.u32 %v1410, 4294901760
        %v1699 = vsub.f32 %v1410, %v1698
        %1700 = vmatmul.mubr.f32.gmra.mxu0 %v1699
        %v1701 = vpop.f32.mrf.mxu0
        %v1702 = vadd.f32 %v1607, %v1701
        %v1703 = vpop.f32.mrf.mxu0
        %1704 = vmatprep.mubr.f32.mxu0 0.0
        %v1705 = vand.u32 %v1412, 4294901760
        %v1706 = vsub.f32 %v1412, %v1705
        %1707 = vmatmul.mubr.f32.gmra.mxu0 %v1706
        %v1708 = vpop.f32.mrf.mxu0
        %v1709 = vadd.f32 %v1613, %v1708
        %v1710 = vpop.f32.mrf.mxu0
        %1711 = vmatprep.mubr.f32.mxu0 0.0
        %v1712 = vand.u32 %v1414, 4294901760
        %v1713 = vsub.f32 %v1414, %v1712
        %1714 = vmatmul.mubr.f32.gmra.mxu0 %v1713
        %v1715 = vpop.f32.mrf.mxu0
        %v1716 = vadd.f32 %v1619, %v1715
        %v1717 = vpop.f32.mrf.mxu0
        %1718 = vdwg.mxu0
        %1719 = vmatprep.subr.mxu0 0.0
        %1720 = vmatpush1.msra.mxu0 0.0
        %1721 = vmatprep.subr.mxu0 0.0
        %1722 = vmatpush1.msra.mxu0 0.0
        %1723 = vmatprep.subr.mxu0 0.0
        %1724 = vmatpush1.msra.mxu0 0.0
        %1725 = vmatprep.subr.mxu0 0.0
        %1726 = vmatpush1.msra.mxu0 0.0
        %1727 = vmatprep.subr.mxu0 0.0
        %1728 = vmatpush1.msra.mxu0 0.0
        %1729 = vmatprep.subr.mxu0 0.0
        %1730 = vmatpush1.msra.mxu0 0.0
        %1731 = vmatprep.subr.mxu0 0.0
        %1732 = vmatpush1.msra.mxu0 0.0
        %1733 = vmatprep.subr.mxu0 0.0
        %1734 = vmatpush1.msra.mxu0 0.0
        %1735 = vmatprep.subr.mxu0 0.0
        %1736 = vmatpush1.msra.mxu0 0.0
        %1737 = vmatprep.subr.mxu0 0.0
        %1738 = vmatpush1.msra.mxu0 0.0
        %1739 = vmatprep.subr.mxu0 0.0
        %1740 = vmatpush1.msra.mxu0 0.0
        %1741 = vmatprep.subr.mxu0 0.0
        %1742 = vmatpush1.msra.mxu0 0.0
        %1743 = vmatprep.subr.mxu0 0.0
        %1744 = vmatpush1.msra.mxu0 0.0
        %1745 = vmatprep.subr.mxu0 0.0
        %1746 = vmatpush1.msra.mxu0 0.0
        %1747 = vmatprep.subr.mxu0 0.0
        %v1748 = vand.u32 %v1395, 4294901760
        %1749 = vmatpush1.msra.mxu0 %v1748
        %1750 = vmatprep.subr.mxu0 0.0
        %v1751 = vand.u32 %v1394, 4294901760
        %1752 = vmatpush1.msra.mxu0 %v1751
        %1753 = vmatprep.subr.mxu0 0.0
        %1754 = vmatpush2.msra.mxu0 0.0
        %1755 = vmatprep.subr.mxu0 0.0
        %1756 = vmatpush2.msra.mxu0 0.0
        %1757 = vmatprep.subr.mxu0 0.0
        %1758 = vmatpush2.msra.mxu0 0.0
        %1759 = vmatprep.subr.mxu0 0.0
        %1760 = vmatpush2.msra.mxu0 0.0
        %1761 = vmatprep.subr.mxu0 0.0
        %1762 = vmatpush2.msra.mxu0 0.0
        %1763 = vmatprep.subr.mxu0 0.0
        %1764 = vmatpush2.msra.mxu0 0.0
        %1765 = vmatprep.subr.mxu0 0.0
        %1766 = vmatpush2.msra.mxu0 0.0
        %1767 = vmatprep.subr.mxu0 0.0
        %1768 = vmatpush2.msra.mxu0 0.0
        %1769 = vmatprep.subr.mxu0 0.0
        %1770 = vmatpush2.msra.mxu0 0.0
        %1771 = vmatprep.subr.mxu0 0.0
        %1772 = vmatpush2.msra.mxu0 0.0
        %1773 = vmatprep.subr.mxu0 0.0
        %1774 = vmatpush2.msra.mxu0 0.0
        %1775 = vmatprep.subr.mxu0 0.0
        %1776 = vmatpush2.msra.mxu0 0.0
        %1777 = vmatprep.subr.mxu0 0.0
        %1778 = vmatpush2.msra.mxu0 0.0
        %1779 = vmatprep.subr.mxu0 0.0
        %1780 = vmatpush2.msra.mxu0 0.0
        %1781 = vmatprep.subr.mxu0 0.0
        %1782 = vmatpush2.msra.mxu0 0.0
        %1783 = vmatprep.subr.mxu0 0.0
        %1784 = vmatpush2.msra.mxu0 0.0
        %1785 = vmatprep.mubr.f32.mxu0 0.0
        %v1786 = vand.u32 %v1408, 4294901760
        %v1787 = vsub.f32 %v1408, %v1786
        %v1788 = vand.u32 %v1787, 4294901760
        %1789 = vmatmul.mubr.f32.gmra.mxu0 %v1788
        %v1790 = vpop.f32.mrf.mxu0
        %v1791 = vadd.f32 %v1695, %v1790
        %v1792 = vpop.f32.mrf.mxu0
        %1793 = vmatprep.mubr.f32.mxu0 0.0
        %v1794 = vand.u32 %v1410, 4294901760
        %v1795 = vsub.f32 %v1410, %v1794
        %v1796 = vand.u32 %v1795, 4294901760
        %1797 = vmatmul.mubr.f32.gmra.mxu0 %v1796
        %v1798 = vpop.f32.mrf.mxu0
        %v1799 = vadd.f32 %v1702, %v1798
        %v1800 = vpop.f32.mrf.mxu0
        %1801 = vmatprep.mubr.f32.mxu0 0.0
        %v1802 = vand.u32 %v1412, 4294901760
        %v1803 = vsub.f32 %v1412, %v1802
        %v1804 = vand.u32 %v1803, 4294901760
        %1805 = vmatmul.mubr.f32.gmra.mxu0 %v1804
        %v1806 = vpop.f32.mrf.mxu0
        %v1807 = vadd.f32 %v1709, %v1806
        %v1808 = vpop.f32.mrf.mxu0
        %1809 = vmatprep.mubr.f32.mxu0 0.0
        %v1810 = vand.u32 %v1414, 4294901760
        %v1811 = vsub.f32 %v1414, %v1810
        %v1812 = vand.u32 %v1811, 4294901760
        %1813 = vmatmul.mubr.f32.gmra.mxu0 %v1812
        %v1814 = vpop.f32.mrf.mxu0
        %v1815 = vadd.f32 %v1716, %v1814
        %v1816 = vpop.f32.mrf.mxu0
        %1817 = vdwg.mxu0
        %1818 = vmatprep.subr.mxu0 0.0
        %1819 = vmatpush1.msra.mxu0 0.0
        %1820 = vmatprep.subr.mxu0 0.0
        %1821 = vmatpush1.msra.mxu0 0.0
        %1822 = vmatprep.subr.mxu0 0.0
        %1823 = vmatpush1.msra.mxu0 0.0
        %1824 = vmatprep.subr.mxu0 0.0
        %1825 = vmatpush1.msra.mxu0 0.0
        %1826 = vmatprep.subr.mxu0 0.0
        %1827 = vmatpush1.msra.mxu0 0.0
        %1828 = vmatprep.subr.mxu0 0.0
        %1829 = vmatpush1.msra.mxu0 0.0
        %1830 = vmatprep.subr.mxu0 0.0
        %1831 = vmatpush1.msra.mxu0 0.0
        %1832 = vmatprep.subr.mxu0 0.0
        %1833 = vmatpush1.msra.mxu0 0.0
        %1834 = vmatprep.subr.mxu0 0.0
        %1835 = vmatpush1.msra.mxu0 0.0
        %1836 = vmatprep.subr.mxu0 0.0
        %1837 = vmatpush1.msra.mxu0 0.0
        %1838 = vmatprep.subr.mxu0 0.0
        %1839 = vmatpush1.msra.mxu0 0.0
        %1840 = vmatprep.subr.mxu0 0.0
        %1841 = vmatpush1.msra.mxu0 0.0
        %1842 = vmatprep.subr.mxu0 0.0
        %1843 = vmatpush1.msra.mxu0 0.0
        %1844 = vmatprep.subr.mxu0 0.0
        %1845 = vmatpush1.msra.mxu0 0.0
        %1846 = vmatprep.subr.mxu0 0.0
        %v1847 = vand.u32 %v1395, 4294901760
        %v1848 = vsub.f32 %v1395, %v1847
        %v1849 = vand.u32 %v1848, 4294901760
        %1850 = vmatpush1.msra.mxu0 %v1849
        %1851 = vmatprep.subr.mxu0 0.0
        %v1852 = vand.u32 %v1394, 4294901760
        %v1853 = vsub.f32 %v1394, %v1852
        %v1854 = vand.u32 %v1853, 4294901760
        %1855 = vmatpush1.msra.mxu0 %v1854
        %1856 = vmatprep.subr.mxu0 0.0
        %1857 = vmatpush2.msra.mxu0 0.0
        %1858 = vmatprep.subr.mxu0 0.0
        %1859 = vmatpush2.msra.mxu0 0.0
        %1860 = vmatprep.subr.mxu0 0.0
        %1861 = vmatpush2.msra.mxu0 0.0
        %1862 = vmatprep.subr.mxu0 0.0
        %1863 = vmatpush2.msra.mxu0 0.0
        %1864 = vmatprep.subr.mxu0 0.0
        %1865 = vmatpush2.msra.mxu0 0.0
        %1866 = vmatprep.subr.mxu0 0.0
        %1867 = vmatpush2.msra.mxu0 0.0
        %1868 = vmatprep.subr.mxu0 0.0
        %1869 = vmatpush2.msra.mxu0 0.0
        %1870 = vmatprep.subr.mxu0 0.0
        %1871 = vmatpush2.msra.mxu0 0.0
        %1872 = vmatprep.subr.mxu0 0.0
        %1873 = vmatpush2.msra.mxu0 0.0
        %1874 = vmatprep.subr.mxu0 0.0
        %1875 = vmatpush2.msra.mxu0 0.0
        %1876 = vmatprep.subr.mxu0 0.0
        %1877 = vmatpush2.msra.mxu0 0.0
        %1878 = vmatprep.subr.mxu0 0.0
        %1879 = vmatpush2.msra.mxu0 0.0
        %1880 = vmatprep.subr.mxu0 0.0
        %1881 = vmatpush2.msra.mxu0 0.0
        %1882 = vmatprep.subr.mxu0 0.0
        %1883 = vmatpush2.msra.mxu0 0.0
        %1884 = vmatprep.subr.mxu0 0.0
        %1885 = vmatpush2.msra.mxu0 0.0
        %1886 = vmatprep.subr.mxu0 0.0
        %1887 = vmatpush2.msra.mxu0 0.0
        %1888 = vmatprep.mubr.f32.mxu0 0.0
        %v1889 = vand.u32 %v1408, 4294901760
        %1890 = vmatmul.mubr.f32.gmra.mxu0 %v1889
        %v1891 = vpop.f32.mrf.mxu0
        %v1892 = vadd.f32 %v1791, %v1891
        %v1893 = vpop.f32.mrf.mxu0
        %1894 = vmatprep.mubr.f32.mxu0 0.0
        %v1895 = vand.u32 %v1410, 4294901760
        %1896 = vmatmul.mubr.f32.gmra.mxu0 %v1895
        %v1897 = vpop.f32.mrf.mxu0
        %v1898 = vadd.f32 %v1799, %v1897
        %v1899 = vpop.f32.mrf.mxu0
        %1900 = vmatprep.mubr.f32.mxu0 0.0
        %v1901 = vand.u32 %v1412, 4294901760
        %1902 = vmatmul.mubr.f32.gmra.mxu0 %v1901
        %v1903 = vpop.f32.mrf.mxu0
        %v1904 = vadd.f32 %v1807, %v1903
        %v1905 = vpop.f32.mrf.mxu0
        %1906 = vmatprep.mubr.f32.mxu0 0.0
        %v1907 = vand.u32 %v1414, 4294901760
        %1908 = vmatmul.mubr.f32.gmra.mxu0 %v1907
        %v1909 = vpop.f32.mrf.mxu0
        %v1910 = vadd.f32 %v1815, %v1909
        %v1911 = vpop.f32.mrf.mxu0
        %1912 = vdwg.mxu0
        %1913 = vmatprep.subr.mxu0 0.0
        %1914 = vmatpush1.msra.mxu0 0.0
        %1915 = vmatprep.subr.mxu0 0.0
        %1916 = vmatpush1.msra.mxu0 0.0
        %1917 = vmatprep.subr.mxu0 0.0
        %1918 = vmatpush1.msra.mxu0 0.0
        %1919 = vmatprep.subr.mxu0 0.0
        %1920 = vmatpush1.msra.mxu0 0.0
        %1921 = vmatprep.subr.mxu0 0.0
        %1922 = vmatpush1.msra.mxu0 0.0
        %1923 = vmatprep.subr.mxu0 0.0
        %1924 = vmatpush1.msra.mxu0 0.0
        %1925 = vmatprep.subr.mxu0 0.0
        %1926 = vmatpush1.msra.mxu0 0.0
        %1927 = vmatprep.subr.mxu0 0.0
        %1928 = vmatpush1.msra.mxu0 0.0
        %1929 = vmatprep.subr.mxu0 0.0
        %1930 = vmatpush1.msra.mxu0 0.0
        %1931 = vmatprep.subr.mxu0 0.0
        %1932 = vmatpush1.msra.mxu0 0.0
        %1933 = vmatprep.subr.mxu0 0.0
        %1934 = vmatpush1.msra.mxu0 0.0
        %1935 = vmatprep.subr.mxu0 0.0
        %1936 = vmatpush1.msra.mxu0 0.0
        %1937 = vmatprep.subr.mxu0 0.0
        %1938 = vmatpush1.msra.mxu0 0.0
        %1939 = vmatprep.subr.mxu0 0.0
        %1940 = vmatpush1.msra.mxu0 0.0
        %1941 = vmatprep.subr.mxu0 0.0
        %v1942 = vand.u32 %v1395, 4294901760
        %1943 = vmatpush1.msra.mxu0 %v1942
        %1944 = vmatprep.subr.mxu0 0.0
        %v1945 = vand.u32 %v1394, 4294901760
        %1946 = vmatpush1.msra.mxu0 %v1945
        %1947 = vmatprep.subr.mxu0 0.0
        %1948 = vmatpush2.msra.mxu0 0.0
        %1949 = vmatprep.subr.mxu0 0.0
        %1950 = vmatpush2.msra.mxu0 0.0
        %1951 = vmatprep.subr.mxu0 0.0
        %1952 = vmatpush2.msra.mxu0 0.0
        %1953 = vmatprep.subr.mxu0 0.0
        %1954 = vmatpush2.msra.mxu0 0.0
        %1955 = vmatprep.subr.mxu0 0.0
        %1956 = vmatpush2.msra.mxu0 0.0
        %1957 = vmatprep.subr.mxu0 0.0
        %1958 = vmatpush2.msra.mxu0 0.0
        %1959 = vmatprep.subr.mxu0 0.0
        %1960 = vmatpush2.msra.mxu0 0.0
        %1961 = vmatprep.subr.mxu0 0.0
        %1962 = vmatpush2.msra.mxu0 0.0
        %1963 = vmatprep.subr.mxu0 0.0
        %1964 = vmatpush2.msra.mxu0 0.0
        %1965 = vmatprep.subr.mxu0 0.0
        %1966 = vmatpush2.msra.mxu0 0.0
        %1967 = vmatprep.subr.mxu0 0.0
        %1968 = vmatpush2.msra.mxu0 0.0
        %1969 = vmatprep.subr.mxu0 0.0
        %1970 = vmatpush2.msra.mxu0 0.0
        %1971 = vmatprep.subr.mxu0 0.0
        %1972 = vmatpush2.msra.mxu0 0.0
        %1973 = vmatprep.subr.mxu0 0.0
        %1974 = vmatpush2.msra.mxu0 0.0
        %1975 = vmatprep.subr.mxu0 0.0
        %1976 = vmatpush2.msra.mxu0 0.0
        %1977 = vmatprep.subr.mxu0 0.0
        %1978 = vmatpush2.msra.mxu0 0.0
        %1979 = vmatprep.mubr.f32.mxu0 0.0
        %v1980 = vand.u32 %v1408, 4294901760
        %1981 = vmatmul.mubr.f32.gmra.mxu0 %v1980
        %v1982 = vpop.f32.mrf.mxu0
        %v1983 = vadd.f32 %v1892, %v1982
        %v1984 = vpop.f32.mrf.mxu0
        %1985 = vmatprep.mubr.f32.mxu0 0.0
        %v1986 = vand.u32 %v1410, 4294901760
        %1987 = vmatmul.mubr.f32.gmra.mxu0 %v1986
        %v1988 = vpop.f32.mrf.mxu0
        %v1989 = vadd.f32 %v1898, %v1988
        %v1990 = vpop.f32.mrf.mxu0
        %1991 = vmatprep.mubr.f32.mxu0 0.0
        %v1992 = vand.u32 %v1412, 4294901760
        %1993 = vmatmul.mubr.f32.gmra.mxu0 %v1992
        %v1994 = vpop.f32.mrf.mxu0
        %v1995 = vadd.f32 %v1904, %v1994
        %v1996 = vpop.f32.mrf.mxu0
        %1997 = vmatprep.mubr.f32.mxu0 0.0
        %v1998 = vand.u32 %v1414, 4294901760
        %1999 = vmatmul.mubr.f32.gmra.mxu0 %v1998
        %v2000 = vpop.f32.mrf.mxu0
        %v2001 = vadd.f32 %v1910, %v2000
        %v2002 = vpop.f32.mrf.mxu0
        %2003 = vdwg.mxu0
        %s2004 = scalar_lea.vmem %s179, 16 [#allocation5]
        %2005 = vst.msk [vmem:[%s2004] sm:$0xff] %vm789, %v1983
        %2006 = vst.msk [vmem:[%s2004 + $0x20] sm:$0xff] %vm789, %v1989
        %2007 = vst.msk [vmem:[%s2004 + $0x40] sm:$0xff] %vm789, %v1995
        %2008 = vst.msk [vmem:[%s2004 + $0x60] sm:$0xff] %vm789, %v2001
        %v2009 = vld [vmem:[%s794] sm:$0xff]
        %v2010 = vld [vmem:[%s794 + $0x8] sm:$0xff]
        %2011 = vmatprep.subr.mxu0 0.0
        %2012 = vmatpush1.msra.mxu0 0.0
        %2013 = vmatprep.subr.mxu0 0.0
        %2014 = vmatpush1.msra.mxu0 0.0
        %2015 = vmatprep.subr.mxu0 0.0
        %2016 = vmatpush1.msra.mxu0 0.0
        %2017 = vmatprep.subr.mxu0 0.0
        %2018 = vmatpush1.msra.mxu0 0.0
        %2019 = vmatprep.subr.mxu0 0.0
        %2020 = vmatpush1.msra.mxu0 0.0
        %2021 = vmatprep.subr.mxu0 0.0
        %2022 = vmatpush1.msra.mxu0 0.0
        %2023 = vmatprep.subr.mxu0 0.0
        %2024 = vmatpush1.msra.mxu0 0.0
        %2025 = vmatprep.subr.mxu0 0.0
        %2026 = vmatpush1.msra.mxu0 0.0
        %2027 = vmatprep.subr.mxu0 0.0
        %2028 = vmatpush1.msra.mxu0 0.0
        %2029 = vmatprep.subr.mxu0 0.0
        %2030 = vmatpush1.msra.mxu0 0.0
        %2031 = vmatprep.subr.mxu0 0.0
        %2032 = vmatpush1.msra.mxu0 0.0
        %2033 = vmatprep.subr.mxu0 0.0
        %2034 = vmatpush1.msra.mxu0 0.0
        %2035 = vmatprep.subr.mxu0 0.0
        %2036 = vmatpush1.msra.mxu0 0.0
        %2037 = vmatprep.subr.mxu0 0.0
        %2038 = vmatpush1.msra.mxu0 0.0
        %2039 = vmatprep.subr.mxu0 0.0
        %v2040 = vand.u32 %v2010, 4294901760
        %2041 = vmatpush1.msra.mxu0 %v2040
        %2042 = vmatprep.subr.mxu0 0.0
        %v2043 = vand.u32 %v2009, 4294901760
        %2044 = vmatpush1.msra.mxu0 %v2043
        %2045 = vmatprep.subr.mxu0 0.0
        %2046 = vmatpush2.msra.mxu0 0.0
        %2047 = vmatprep.subr.mxu0 0.0
        %2048 = vmatpush2.msra.mxu0 0.0
        %2049 = vmatprep.subr.mxu0 0.0
        %2050 = vmatpush2.msra.mxu0 0.0
        %2051 = vmatprep.subr.mxu0 0.0
        %2052 = vmatpush2.msra.mxu0 0.0
        %2053 = vmatprep.subr.mxu0 0.0
        %2054 = vmatpush2.msra.mxu0 0.0
        %2055 = vmatprep.subr.mxu0 0.0
        %2056 = vmatpush2.msra.mxu0 0.0
        %2057 = vmatprep.subr.mxu0 0.0
        %2058 = vmatpush2.msra.mxu0 0.0
        %2059 = vmatprep.subr.mxu0 0.0
        %2060 = vmatpush2.msra.mxu0 0.0
        %2061 = vmatprep.subr.mxu0 0.0
        %2062 = vmatpush2.msra.mxu0 0.0
        %2063 = vmatprep.subr.mxu0 0.0
        %2064 = vmatpush2.msra.mxu0 0.0
        %2065 = vmatprep.subr.mxu0 0.0
        %2066 = vmatpush2.msra.mxu0 0.0
        %2067 = vmatprep.subr.mxu0 0.0
        %2068 = vmatpush2.msra.mxu0 0.0
        %2069 = vmatprep.subr.mxu0 0.0
        %2070 = vmatpush2.msra.mxu0 0.0
        %2071 = vmatprep.subr.mxu0 0.0
        %2072 = vmatpush2.msra.mxu0 0.0
        %2073 = vmatprep.subr.mxu0 0.0
        %2074 = vmatpush2.msra.mxu0 0.0
        %2075 = vmatprep.subr.mxu0 0.0
        %2076 = vmatpush2.msra.mxu0 0.0
        %2077 = vmatprep.mubr.f32.mxu0 0.0
        %v2078 = vand.u32 %v1408, 4294901760
        %v2079 = vsub.f32 %v1408, %v2078
        %v2080 = vand.u32 %v2079, 4294901760
        %v2081 = vsub.f32 %v2079, %v2080
        %v2082 = vand.u32 %v2081, 4294901760
        %2083 = vmatmul.mubr.f32.gmra.mxu0 %v2082
        %v2084 = vpop.f32.mrf.mxu0
        %v2085 = vadd.f32 0.0, %v2084
        %v2086 = vpop.f32.mrf.mxu0
        %2087 = vmatprep.mubr.f32.mxu0 0.0
        %v2088 = vand.u32 %v1410, 4294901760
        %v2089 = vsub.f32 %v1410, %v2088
        %v2090 = vand.u32 %v2089, 4294901760
        %v2091 = vsub.f32 %v2089, %v2090
        %v2092 = vand.u32 %v2091, 4294901760
        %2093 = vmatmul.mubr.f32.gmra.mxu0 %v2092
        %v2094 = vpop.f32.mrf.mxu0
        %v2095 = vadd.f32 0.0, %v2094
        %v2096 = vpop.f32.mrf.mxu0
        %2097 = vmatprep.mubr.f32.mxu0 0.0
        %v2098 = vand.u32 %v1412, 4294901760
        %v2099 = vsub.f32 %v1412, %v2098
        %v2100 = vand.u32 %v2099, 4294901760
        %v2101 = vsub.f32 %v2099, %v2100
        %v2102 = vand.u32 %v2101, 4294901760
        %2103 = vmatmul.mubr.f32.gmra.mxu0 %v2102
        %v2104 = vpop.f32.mrf.mxu0
        %v2105 = vadd.f32 0.0, %v2104
        %v2106 = vpop.f32.mrf.mxu0
        %2107 = vmatprep.mubr.f32.mxu0 0.0
        %v2108 = vand.u32 %v1414, 4294901760
        %v2109 = vsub.f32 %v1414, %v2108
        %v2110 = vand.u32 %v2109, 4294901760
        %v2111 = vsub.f32 %v2109, %v2110
        %v2112 = vand.u32 %v2111, 4294901760
        %2113 = vmatmul.mubr.f32.gmra.mxu0 %v2112
        %v2114 = vpop.f32.mrf.mxu0
        %v2115 = vadd.f32 0.0, %v2114
        %v2116 = vpop.f32.mrf.mxu0
        %2117 = vdwg.mxu0
        %2118 = vmatprep.subr.mxu0 0.0
        %2119 = vmatpush1.msra.mxu0 0.0
        %2120 = vmatprep.subr.mxu0 0.0
        %2121 = vmatpush1.msra.mxu0 0.0
        %2122 = vmatprep.subr.mxu0 0.0
        %2123 = vmatpush1.msra.mxu0 0.0
        %2124 = vmatprep.subr.mxu0 0.0
        %2125 = vmatpush1.msra.mxu0 0.0
        %2126 = vmatprep.subr.mxu0 0.0
        %2127 = vmatpush1.msra.mxu0 0.0
        %2128 = vmatprep.subr.mxu0 0.0
        %2129 = vmatpush1.msra.mxu0 0.0
        %2130 = vmatprep.subr.mxu0 0.0
        %2131 = vmatpush1.msra.mxu0 0.0
        %2132 = vmatprep.subr.mxu0 0.0
        %2133 = vmatpush1.msra.mxu0 0.0
        %2134 = vmatprep.subr.mxu0 0.0
        %2135 = vmatpush1.msra.mxu0 0.0
        %2136 = vmatprep.subr.mxu0 0.0
        %2137 = vmatpush1.msra.mxu0 0.0
        %2138 = vmatprep.subr.mxu0 0.0
        %2139 = vmatpush1.msra.mxu0 0.0
        %2140 = vmatprep.subr.mxu0 0.0
        %2141 = vmatpush1.msra.mxu0 0.0
        %2142 = vmatprep.subr.mxu0 0.0
        %2143 = vmatpush1.msra.mxu0 0.0
        %2144 = vmatprep.subr.mxu0 0.0
        %2145 = vmatpush1.msra.mxu0 0.0
        %2146 = vmatprep.subr.mxu0 0.0
        %v2147 = vand.u32 %v2010, 4294901760
        %v2148 = vsub.f32 %v2010, %v2147
        %v2149 = vand.u32 %v2148, 4294901760
        %v2150 = vsub.f32 %v2148, %v2149
        %v2151 = vand.u32 %v2150, 4294901760
        %2152 = vmatpush1.msra.mxu0 %v2151
        %2153 = vmatprep.subr.mxu0 0.0
        %v2154 = vand.u32 %v2009, 4294901760
        %v2155 = vsub.f32 %v2009, %v2154
        %v2156 = vand.u32 %v2155, 4294901760
        %v2157 = vsub.f32 %v2155, %v2156
        %v2158 = vand.u32 %v2157, 4294901760
        %2159 = vmatpush1.msra.mxu0 %v2158
        %2160 = vmatprep.subr.mxu0 0.0
        %2161 = vmatpush2.msra.mxu0 0.0
        %2162 = vmatprep.subr.mxu0 0.0
        %2163 = vmatpush2.msra.mxu0 0.0
        %2164 = vmatprep.subr.mxu0 0.0
        %2165 = vmatpush2.msra.mxu0 0.0
        %2166 = vmatprep.subr.mxu0 0.0
        %2167 = vmatpush2.msra.mxu0 0.0
        %2168 = vmatprep.subr.mxu0 0.0
        %2169 = vmatpush2.msra.mxu0 0.0
        %2170 = vmatprep.subr.mxu0 0.0
        %2171 = vmatpush2.msra.mxu0 0.0
        %2172 = vmatprep.subr.mxu0 0.0
        %2173 = vmatpush2.msra.mxu0 0.0
        %2174 = vmatprep.subr.mxu0 0.0
        %2175 = vmatpush2.msra.mxu0 0.0
        %2176 = vmatprep.subr.mxu0 0.0
        %2177 = vmatpush2.msra.mxu0 0.0
        %2178 = vmatprep.subr.mxu0 0.0
        %2179 = vmatpush2.msra.mxu0 0.0
        %2180 = vmatprep.subr.mxu0 0.0
        %2181 = vmatpush2.msra.mxu0 0.0
        %2182 = vmatprep.subr.mxu0 0.0
        %2183 = vmatpush2.msra.mxu0 0.0
        %2184 = vmatprep.subr.mxu0 0.0
        %2185 = vmatpush2.msra.mxu0 0.0
        %2186 = vmatprep.subr.mxu0 0.0
        %2187 = vmatpush2.msra.mxu0 0.0
        %2188 = vmatprep.subr.mxu0 0.0
        %2189 = vmatpush2.msra.mxu0 0.0
        %2190 = vmatprep.subr.mxu0 0.0
        %2191 = vmatpush2.msra.mxu0 0.0
        %2192 = vmatprep.mubr.f32.mxu0 0.0
        %v2193 = vand.u32 %v1408, 4294901760
        %2194 = vmatmul.mubr.f32.gmra.mxu0 %v2193
        %v2195 = vpop.f32.mrf.mxu0
        %v2196 = vadd.f32 %v2085, %v2195
        %v2197 = vpop.f32.mrf.mxu0
        %2198 = vmatprep.mubr.f32.mxu0 0.0
        %v2199 = vand.u32 %v1410, 4294901760
        %2200 = vmatmul.mubr.f32.gmra.mxu0 %v2199
        %v2201 = vpop.f32.mrf.mxu0
        %v2202 = vadd.f32 %v2095, %v2201
        %v2203 = vpop.f32.mrf.mxu0
        %2204 = vmatprep.mubr.f32.mxu0 0.0
        %v2205 = vand.u32 %v1412, 4294901760
        %2206 = vmatmul.mubr.f32.gmra.mxu0 %v2205
        %v2207 = vpop.f32.mrf.mxu0
        %v2208 = vadd.f32 %v2105, %v2207
        %v2209 = vpop.f32.mrf.mxu0
        %2210 = vmatprep.mubr.f32.mxu0 0.0
        %v2211 = vand.u32 %v1414, 4294901760
        %2212 = vmatmul.mubr.f32.gmra.mxu0 %v2211
        %v2213 = vpop.f32.mrf.mxu0
        %v2214 = vadd.f32 %v2115, %v2213
        %v2215 = vpop.f32.mrf.mxu0
        %2216 = vdwg.mxu0
        %2217 = vmatprep.subr.mxu0 0.0
        %2218 = vmatpush1.msra.mxu0 0.0
        %2219 = vmatprep.subr.mxu0 0.0
        %2220 = vmatpush1.msra.mxu0 0.0
        %2221 = vmatprep.subr.mxu0 0.0
        %2222 = vmatpush1.msra.mxu0 0.0
        %2223 = vmatprep.subr.mxu0 0.0
        %2224 = vmatpush1.msra.mxu0 0.0
        %2225 = vmatprep.subr.mxu0 0.0
        %2226 = vmatpush1.msra.mxu0 0.0
        %2227 = vmatprep.subr.mxu0 0.0
        %2228 = vmatpush1.msra.mxu0 0.0
        %2229 = vmatprep.subr.mxu0 0.0
        %2230 = vmatpush1.msra.mxu0 0.0
        %2231 = vmatprep.subr.mxu0 0.0
        %2232 = vmatpush1.msra.mxu0 0.0
        %2233 = vmatprep.subr.mxu0 0.0
        %2234 = vmatpush1.msra.mxu0 0.0
        %2235 = vmatprep.subr.mxu0 0.0
        %2236 = vmatpush1.msra.mxu0 0.0
        %2237 = vmatprep.subr.mxu0 0.0
        %2238 = vmatpush1.msra.mxu0 0.0
        %2239 = vmatprep.subr.mxu0 0.0
        %2240 = vmatpush1.msra.mxu0 0.0
        %2241 = vmatprep.subr.mxu0 0.0
        %2242 = vmatpush1.msra.mxu0 0.0
        %2243 = vmatprep.subr.mxu0 0.0
        %2244 = vmatpush1.msra.mxu0 0.0
        %2245 = vmatprep.subr.mxu0 0.0
        %v2246 = vand.u32 %v2010, 4294901760
        %v2247 = vsub.f32 %v2010, %v2246
        %2248 = vmatpush1.msra.mxu0 %v2247
        %2249 = vmatprep.subr.mxu0 0.0
        %v2250 = vand.u32 %v2009, 4294901760
        %v2251 = vsub.f32 %v2009, %v2250
        %2252 = vmatpush1.msra.mxu0 %v2251
        %2253 = vmatprep.subr.mxu0 0.0
        %2254 = vmatpush2.msra.mxu0 0.0
        %2255 = vmatprep.subr.mxu0 0.0
        %2256 = vmatpush2.msra.mxu0 0.0
        %2257 = vmatprep.subr.mxu0 0.0
        %2258 = vmatpush2.msra.mxu0 0.0
        %2259 = vmatprep.subr.mxu0 0.0
        %2260 = vmatpush2.msra.mxu0 0.0
        %2261 = vmatprep.subr.mxu0 0.0
        %2262 = vmatpush2.msra.mxu0 0.0
        %2263 = vmatprep.subr.mxu0 0.0
        %2264 = vmatpush2.msra.mxu0 0.0
        %2265 = vmatprep.subr.mxu0 0.0
        %2266 = vmatpush2.msra.mxu0 0.0
        %2267 = vmatprep.subr.mxu0 0.0
        %2268 = vmatpush2.msra.mxu0 0.0
        %2269 = vmatprep.subr.mxu0 0.0
        %2270 = vmatpush2.msra.mxu0 0.0
        %2271 = vmatprep.subr.mxu0 0.0
        %2272 = vmatpush2.msra.mxu0 0.0
        %2273 = vmatprep.subr.mxu0 0.0
        %2274 = vmatpush2.msra.mxu0 0.0
        %2275 = vmatprep.subr.mxu0 0.0
        %2276 = vmatpush2.msra.mxu0 0.0
        %2277 = vmatprep.subr.mxu0 0.0
        %2278 = vmatpush2.msra.mxu0 0.0
        %2279 = vmatprep.subr.mxu0 0.0
        %2280 = vmatpush2.msra.mxu0 0.0
        %2281 = vmatprep.subr.mxu0 0.0
        %2282 = vmatpush2.msra.mxu0 0.0
        %2283 = vmatprep.subr.mxu0 0.0
        %2284 = vmatpush2.msra.mxu0 0.0
        %2285 = vmatprep.mubr.f32.mxu0 0.0
        %v2286 = vand.u32 %v1408, 4294901760
        %v2287 = vsub.f32 %v1408, %v2286
        %2288 = vmatmul.mubr.f32.gmra.mxu0 %v2287
        %v2289 = vpop.f32.mrf.mxu0
        %v2290 = vadd.f32 %v2196, %v2289
        %v2291 = vpop.f32.mrf.mxu0
        %2292 = vmatprep.mubr.f32.mxu0 0.0
        %v2293 = vand.u32 %v1410, 4294901760
        %v2294 = vsub.f32 %v1410, %v2293
        %2295 = vmatmul.mubr.f32.gmra.mxu0 %v2294
        %v2296 = vpop.f32.mrf.mxu0
        %v2297 = vadd.f32 %v2202, %v2296
        %v2298 = vpop.f32.mrf.mxu0
        %2299 = vmatprep.mubr.f32.mxu0 0.0
        %v2300 = vand.u32 %v1412, 4294901760
        %v2301 = vsub.f32 %v1412, %v2300
        %2302 = vmatmul.mubr.f32.gmra.mxu0 %v2301
        %v2303 = vpop.f32.mrf.mxu0
        %v2304 = vadd.f32 %v2208, %v2303
        %v2305 = vpop.f32.mrf.mxu0
        %2306 = vmatprep.mubr.f32.mxu0 0.0
        %v2307 = vand.u32 %v1414, 4294901760
        %v2308 = vsub.f32 %v1414, %v2307
        %2309 = vmatmul.mubr.f32.gmra.mxu0 %v2308
        %v2310 = vpop.f32.mrf.mxu0
        %v2311 = vadd.f32 %v2214, %v2310
        %v2312 = vpop.f32.mrf.mxu0
        %2313 = vdwg.mxu0
        %2314 = vmatprep.subr.mxu0 0.0
        %2315 = vmatpush1.msra.mxu0 0.0
        %2316 = vmatprep.subr.mxu0 0.0
        %2317 = vmatpush1.msra.mxu0 0.0
        %2318 = vmatprep.subr.mxu0 0.0
        %2319 = vmatpush1.msra.mxu0 0.0
        %2320 = vmatprep.subr.mxu0 0.0
        %2321 = vmatpush1.msra.mxu0 0.0
        %2322 = vmatprep.subr.mxu0 0.0
        %2323 = vmatpush1.msra.mxu0 0.0
        %2324 = vmatprep.subr.mxu0 0.0
        %2325 = vmatpush1.msra.mxu0 0.0
        %2326 = vmatprep.subr.mxu0 0.0
        %2327 = vmatpush1.msra.mxu0 0.0
        %2328 = vmatprep.subr.mxu0 0.0
        %2329 = vmatpush1.msra.mxu0 0.0
        %2330 = vmatprep.subr.mxu0 0.0
        %2331 = vmatpush1.msra.mxu0 0.0
        %2332 = vmatprep.subr.mxu0 0.0
        %2333 = vmatpush1.msra.mxu0 0.0
        %2334 = vmatprep.subr.mxu0 0.0
        %2335 = vmatpush1.msra.mxu0 0.0
        %2336 = vmatprep.subr.mxu0 0.0
        %2337 = vmatpush1.msra.mxu0 0.0
        %2338 = vmatprep.subr.mxu0 0.0
        %2339 = vmatpush1.msra.mxu0 0.0
        %2340 = vmatprep.subr.mxu0 0.0
        %2341 = vmatpush1.msra.mxu0 0.0
        %2342 = vmatprep.subr.mxu0 0.0
        %v2343 = vand.u32 %v2010, 4294901760
        %2344 = vmatpush1.msra.mxu0 %v2343
        %2345 = vmatprep.subr.mxu0 0.0
        %v2346 = vand.u32 %v2009, 4294901760
        %2347 = vmatpush1.msra.mxu0 %v2346
        %2348 = vmatprep.subr.mxu0 0.0
        %2349 = vmatpush2.msra.mxu0 0.0
        %2350 = vmatprep.subr.mxu0 0.0
        %2351 = vmatpush2.msra.mxu0 0.0
        %2352 = vmatprep.subr.mxu0 0.0
        %2353 = vmatpush2.msra.mxu0 0.0
        %2354 = vmatprep.subr.mxu0 0.0
        %2355 = vmatpush2.msra.mxu0 0.0
        %2356 = vmatprep.subr.mxu0 0.0
        %2357 = vmatpush2.msra.mxu0 0.0
        %2358 = vmatprep.subr.mxu0 0.0
        %2359 = vmatpush2.msra.mxu0 0.0
        %2360 = vmatprep.subr.mxu0 0.0
        %2361 = vmatpush2.msra.mxu0 0.0
        %2362 = vmatprep.subr.mxu0 0.0
        %2363 = vmatpush2.msra.mxu0 0.0
        %2364 = vmatprep.subr.mxu0 0.0
        %2365 = vmatpush2.msra.mxu0 0.0
        %2366 = vmatprep.subr.mxu0 0.0
        %2367 = vmatpush2.msra.mxu0 0.0
        %2368 = vmatprep.subr.mxu0 0.0
        %2369 = vmatpush2.msra.mxu0 0.0
        %2370 = vmatprep.subr.mxu0 0.0
        %2371 = vmatpush2.msra.mxu0 0.0
        %2372 = vmatprep.subr.mxu0 0.0
        %2373 = vmatpush2.msra.mxu0 0.0
        %2374 = vmatprep.subr.mxu0 0.0
        %2375 = vmatpush2.msra.mxu0 0.0
        %2376 = vmatprep.subr.mxu0 0.0
        %2377 = vmatpush2.msra.mxu0 0.0
        %2378 = vmatprep.subr.mxu0 0.0
        %2379 = vmatpush2.msra.mxu0 0.0
        %2380 = vmatprep.mubr.f32.mxu0 0.0
        %v2381 = vand.u32 %v1408, 4294901760
        %v2382 = vsub.f32 %v1408, %v2381
        %v2383 = vand.u32 %v2382, 4294901760
        %2384 = vmatmul.mubr.f32.gmra.mxu0 %v2383
        %v2385 = vpop.f32.mrf.mxu0
        %v2386 = vadd.f32 %v2290, %v2385
        %v2387 = vpop.f32.mrf.mxu0
        %2388 = vmatprep.mubr.f32.mxu0 0.0
        %v2389 = vand.u32 %v1410, 4294901760
        %v2390 = vsub.f32 %v1410, %v2389
        %v2391 = vand.u32 %v2390, 4294901760
        %2392 = vmatmul.mubr.f32.gmra.mxu0 %v2391
        %v2393 = vpop.f32.mrf.mxu0
        %v2394 = vadd.f32 %v2297, %v2393
        %v2395 = vpop.f32.mrf.mxu0
        %2396 = vmatprep.mubr.f32.mxu0 0.0
        %v2397 = vand.u32 %v1412, 4294901760
        %v2398 = vsub.f32 %v1412, %v2397
        %v2399 = vand.u32 %v2398, 4294901760
        %2400 = vmatmul.mubr.f32.gmra.mxu0 %v2399
        %v2401 = vpop.f32.mrf.mxu0
        %v2402 = vadd.f32 %v2304, %v2401
        %v2403 = vpop.f32.mrf.mxu0
        %2404 = vmatprep.mubr.f32.mxu0 0.0
        %v2405 = vand.u32 %v1414, 4294901760
        %v2406 = vsub.f32 %v1414, %v2405
        %v2407 = vand.u32 %v2406, 4294901760
        %2408 = vmatmul.mubr.f32.gmra.mxu0 %v2407
        %v2409 = vpop.f32.mrf.mxu0
        %v2410 = vadd.f32 %v2311, %v2409
        %v2411 = vpop.f32.mrf.mxu0
        %2412 = vdwg.mxu0
        %2413 = vmatprep.subr.mxu0 0.0
        %2414 = vmatpush1.msra.mxu0 0.0
        %2415 = vmatprep.subr.mxu0 0.0
        %2416 = vmatpush1.msra.mxu0 0.0
        %2417 = vmatprep.subr.mxu0 0.0
        %2418 = vmatpush1.msra.mxu0 0.0
        %2419 = vmatprep.subr.mxu0 0.0
        %2420 = vmatpush1.msra.mxu0 0.0
        %2421 = vmatprep.subr.mxu0 0.0
        %2422 = vmatpush1.msra.mxu0 0.0
        %2423 = vmatprep.subr.mxu0 0.0
        %2424 = vmatpush1.msra.mxu0 0.0
        %2425 = vmatprep.subr.mxu0 0.0
        %2426 = vmatpush1.msra.mxu0 0.0
        %2427 = vmatprep.subr.mxu0 0.0
        %2428 = vmatpush1.msra.mxu0 0.0
        %2429 = vmatprep.subr.mxu0 0.0
        %2430 = vmatpush1.msra.mxu0 0.0
        %2431 = vmatprep.subr.mxu0 0.0
        %2432 = vmatpush1.msra.mxu0 0.0
        %2433 = vmatprep.subr.mxu0 0.0
        %2434 = vmatpush1.msra.mxu0 0.0
        %2435 = vmatprep.subr.mxu0 0.0
        %2436 = vmatpush1.msra.mxu0 0.0
        %2437 = vmatprep.subr.mxu0 0.0
        %2438 = vmatpush1.msra.mxu0 0.0
        %2439 = vmatprep.subr.mxu0 0.0
        %2440 = vmatpush1.msra.mxu0 0.0
        %2441 = vmatprep.subr.mxu0 0.0
        %v2442 = vand.u32 %v2010, 4294901760
        %v2443 = vsub.f32 %v2010, %v2442
        %v2444 = vand.u32 %v2443, 4294901760
        %2445 = vmatpush1.msra.mxu0 %v2444
        %2446 = vmatprep.subr.mxu0 0.0
        %v2447 = vand.u32 %v2009, 4294901760
        %v2448 = vsub.f32 %v2009, %v2447
        %v2449 = vand.u32 %v2448, 4294901760
        %2450 = vmatpush1.msra.mxu0 %v2449
        %2451 = vmatprep.subr.mxu0 0.0
        %2452 = vmatpush2.msra.mxu0 0.0
        %2453 = vmatprep.subr.mxu0 0.0
        %2454 = vmatpush2.msra.mxu0 0.0
        %2455 = vmatprep.subr.mxu0 0.0
        %2456 = vmatpush2.msra.mxu0 0.0
        %2457 = vmatprep.subr.mxu0 0.0
        %2458 = vmatpush2.msra.mxu0 0.0
        %2459 = vmatprep.subr.mxu0 0.0
        %2460 = vmatpush2.msra.mxu0 0.0
        %2461 = vmatprep.subr.mxu0 0.0
        %2462 = vmatpush2.msra.mxu0 0.0
        %2463 = vmatprep.subr.mxu0 0.0
        %2464 = vmatpush2.msra.mxu0 0.0
        %2465 = vmatprep.subr.mxu0 0.0
        %2466 = vmatpush2.msra.mxu0 0.0
        %2467 = vmatprep.subr.mxu0 0.0
        %2468 = vmatpush2.msra.mxu0 0.0
        %2469 = vmatprep.subr.mxu0 0.0
        %2470 = vmatpush2.msra.mxu0 0.0
        %2471 = vmatprep.subr.mxu0 0.0
        %2472 = vmatpush2.msra.mxu0 0.0
        %2473 = vmatprep.subr.mxu0 0.0
        %2474 = vmatpush2.msra.mxu0 0.0
        %2475 = vmatprep.subr.mxu0 0.0
        %2476 = vmatpush2.msra.mxu0 0.0
        %2477 = vmatprep.subr.mxu0 0.0
        %2478 = vmatpush2.msra.mxu0 0.0
        %2479 = vmatprep.subr.mxu0 0.0
        %2480 = vmatpush2.msra.mxu0 0.0
        %2481 = vmatprep.subr.mxu0 0.0
        %2482 = vmatpush2.msra.mxu0 0.0
        %2483 = vmatprep.mubr.f32.mxu0 0.0
        %v2484 = vand.u32 %v1408, 4294901760
        %2485 = vmatmul.mubr.f32.gmra.mxu0 %v2484
        %v2486 = vpop.f32.mrf.mxu0
        %v2487 = vadd.f32 %v2386, %v2486
        %v2488 = vpop.f32.mrf.mxu0
        %2489 = vmatprep.mubr.f32.mxu0 0.0
        %v2490 = vand.u32 %v1410, 4294901760
        %2491 = vmatmul.mubr.f32.gmra.mxu0 %v2490
        %v2492 = vpop.f32.mrf.mxu0
        %v2493 = vadd.f32 %v2394, %v2492
        %v2494 = vpop.f32.mrf.mxu0
        %2495 = vmatprep.mubr.f32.mxu0 0.0
        %v2496 = vand.u32 %v1412, 4294901760
        %2497 = vmatmul.mubr.f32.gmra.mxu0 %v2496
        %v2498 = vpop.f32.mrf.mxu0
        %v2499 = vadd.f32 %v2402, %v2498
        %v2500 = vpop.f32.mrf.mxu0
        %2501 = vmatprep.mubr.f32.mxu0 0.0
        %v2502 = vand.u32 %v1414, 4294901760
        %2503 = vmatmul.mubr.f32.gmra.mxu0 %v2502
        %v2504 = vpop.f32.mrf.mxu0
        %v2505 = vadd.f32 %v2410, %v2504
        %v2506 = vpop.f32.mrf.mxu0
        %2507 = vdwg.mxu0
        %2508 = vmatprep.subr.mxu0 0.0
        %2509 = vmatpush1.msra.mxu0 0.0
        %2510 = vmatprep.subr.mxu0 0.0
        %2511 = vmatpush1.msra.mxu0 0.0
        %2512 = vmatprep.subr.mxu0 0.0
        %2513 = vmatpush1.msra.mxu0 0.0
        %2514 = vmatprep.subr.mxu0 0.0
        %2515 = vmatpush1.msra.mxu0 0.0
        %2516 = vmatprep.subr.mxu0 0.0
        %2517 = vmatpush1.msra.mxu0 0.0
        %2518 = vmatprep.subr.mxu0 0.0
        %2519 = vmatpush1.msra.mxu0 0.0
        %2520 = vmatprep.subr.mxu0 0.0
        %2521 = vmatpush1.msra.mxu0 0.0
        %2522 = vmatprep.subr.mxu0 0.0
        %2523 = vmatpush1.msra.mxu0 0.0
        %2524 = vmatprep.subr.mxu0 0.0
        %2525 = vmatpush1.msra.mxu0 0.0
        %2526 = vmatprep.subr.mxu0 0.0
        %2527 = vmatpush1.msra.mxu0 0.0
        %2528 = vmatprep.subr.mxu0 0.0
        %2529 = vmatpush1.msra.mxu0 0.0
        %2530 = vmatprep.subr.mxu0 0.0
        %2531 = vmatpush1.msra.mxu0 0.0
        %2532 = vmatprep.subr.mxu0 0.0
        %2533 = vmatpush1.msra.mxu0 0.0
        %2534 = vmatprep.subr.mxu0 0.0
        %2535 = vmatpush1.msra.mxu0 0.0
        %2536 = vmatprep.subr.mxu0 0.0
        %v2537 = vand.u32 %v2010, 4294901760
        %2538 = vmatpush1.msra.mxu0 %v2537
        %2539 = vmatprep.subr.mxu0 0.0
        %v2540 = vand.u32 %v2009, 4294901760
        %2541 = vmatpush1.msra.mxu0 %v2540
        %2542 = vmatprep.subr.mxu0 0.0
        %2543 = vmatpush2.msra.mxu0 0.0
        %2544 = vmatprep.subr.mxu0 0.0
        %2545 = vmatpush2.msra.mxu0 0.0
        %2546 = vmatprep.subr.mxu0 0.0
        %2547 = vmatpush2.msra.mxu0 0.0
        %2548 = vmatprep.subr.mxu0 0.0
        %2549 = vmatpush2.msra.mxu0 0.0
        %2550 = vmatprep.subr.mxu0 0.0
        %2551 = vmatpush2.msra.mxu0 0.0
        %2552 = vmatprep.subr.mxu0 0.0
        %2553 = vmatpush2.msra.mxu0 0.0
        %2554 = vmatprep.subr.mxu0 0.0
        %2555 = vmatpush2.msra.mxu0 0.0
        %2556 = vmatprep.subr.mxu0 0.0
        %2557 = vmatpush2.msra.mxu0 0.0
        %2558 = vmatprep.subr.mxu0 0.0
        %2559 = vmatpush2.msra.mxu0 0.0
        %2560 = vmatprep.subr.mxu0 0.0
        %2561 = vmatpush2.msra.mxu0 0.0
        %2562 = vmatprep.subr.mxu0 0.0
        %2563 = vmatpush2.msra.mxu0 0.0
        %2564 = vmatprep.subr.mxu0 0.0
        %2565 = vmatpush2.msra.mxu0 0.0
        %2566 = vmatprep.subr.mxu0 0.0
        %2567 = vmatpush2.msra.mxu0 0.0
        %2568 = vmatprep.subr.mxu0 0.0
        %2569 = vmatpush2.msra.mxu0 0.0
        %2570 = vmatprep.subr.mxu0 0.0
        %2571 = vmatpush2.msra.mxu0 0.0
        %2572 = vmatprep.subr.mxu0 0.0
        %2573 = vmatpush2.msra.mxu0 0.0
        %2574 = vmatprep.mubr.f32.mxu0 0.0
        %v2575 = vand.u32 %v1408, 4294901760
        %2576 = vmatmul.mubr.f32.gmra.mxu0 %v2575
        %v2577 = vpop.f32.mrf.mxu0
        %v2578 = vadd.f32 %v2487, %v2577
        %v2579 = vpop.f32.mrf.mxu0
        %2580 = vmatprep.mubr.f32.mxu0 0.0
        %v2581 = vand.u32 %v1410, 4294901760
        %2582 = vmatmul.mubr.f32.gmra.mxu0 %v2581
        %v2583 = vpop.f32.mrf.mxu0
        %v2584 = vadd.f32 %v2493, %v2583
        %v2585 = vpop.f32.mrf.mxu0
        %2586 = vmatprep.mubr.f32.mxu0 0.0
        %v2587 = vand.u32 %v1412, 4294901760
        %2588 = vmatmul.mubr.f32.gmra.mxu0 %v2587
        %v2589 = vpop.f32.mrf.mxu0
        %v2590 = vadd.f32 %v2499, %v2589
        %v2591 = vpop.f32.mrf.mxu0
        %2592 = vmatprep.mubr.f32.mxu0 0.0
        %v2593 = vand.u32 %v1414, 4294901760
        %2594 = vmatmul.mubr.f32.gmra.mxu0 %v2593
        %v2595 = vpop.f32.mrf.mxu0
        %v2596 = vadd.f32 %v2505, %v2595
        %v2597 = vpop.f32.mrf.mxu0
        %2598 = vdwg.mxu0
        %s2599 = scalar_lea.vmem %s179, 24 [#allocation5]
        %2600 = vst.msk [vmem:[%s2599] sm:$0xff] %vm789, %v2578
        %2601 = vst.msk [vmem:[%s2599 + $0x20] sm:$0xff] %vm789, %v2584
        %2602 = vst.msk [vmem:[%s2599 + $0x40] sm:$0xff] %vm789, %v2590
        %2603 = vst.msk [vmem:[%s2599 + $0x60] sm:$0xff] %vm789, %v2596
        %s2604 = sand.u32 %s90, 1
        %s2605 = scalar_lea.sflag [#allocation4], %s2604
        %s2606 = sand.u32 %s90, 1
        %s2607 = smul.addr %s2606, 128
        %s2608 = scalar_lea.vmem [#allocation5], %s2607
        // Predicated region
        $region33: #{tpu_custom_call.1} parent=27 // pred_check
          %p2609 = pneg %p100
        $region34: #{tpu_custom_call.1} parent=27 // pred_check_branch
          %2611 = sbr.rel (%p2609) target = $region36
        $region35: #{tpu_custom_call.1} parent=27 // pred_region
          %s2612 = smul.u32 4, %s24
          %s2614 = ssub.s32 2048, 2048
          %2615 = vsyncadd %s2605, %s2614
          %s2616 = smul.addr %s2612, 4
          %s2617 = smul.addr %s23, 16
          %s2618 = sadd.s32 %s2616, %s2617
          %s2619 = smul.addr %s2618, 128
          %s2620 = scalar_lea.hbm %s2, %s2619
          %s2621 = sshll.u32 %s2608, 4
          %s2622 = int_to_ptr.vmem [resolvable:$true] %s2621
          %2627 = dma.vmem_to_hbm [thread:$0]  %s2622, 2048, %s2620, %s2605, 128, 128, 8
        $region36: #{tpu_custom_call.1} parent=27 // pred_fallthru
          _
      $region28: #{tpu_custom_call.1} parent=5 // pred_fallthru
        _
      %p2628 = scmp.le.s32.totalorder 2, %s14
      // Predicated region
      $region37: #{tpu_custom_call.1} parent=5 // pred_check
        %p2629 = pneg %p2628
      $region38: #{tpu_custom_call.1} parent=5 // pred_check_branch
        %2631 = sbr.rel (%p2629) target = $region40
      $region39: #{tpu_custom_call.1} parent=5 // pred_region
        %s2632 = ssub.s32 %s14, 2
        // Predicated region
        $region41: #{tpu_custom_call.1} parent=39 // pred_check
          %p2633 = pneg %p106
        $region42: #{tpu_custom_call.1} parent=39 // pred_check_branch
          %2635 = sbr.rel (%p2633) target = $region44
        $region43: #{tpu_custom_call.1} parent=39 // pred_region
          %s2636 = sand.u32 %s91, 1
          %s2637 = scalar_lea.sflag [#allocation4], %s2636
          %s2638 = sand.u32 %s91, 1
          %s2639 = smul.addr %s2638, 128
          %s2640 = scalar_lea.vmem [#allocation5], %s2639
          %2641 = dma.done %s2637, 2048
        $region44: #{tpu_custom_call.1} parent=39 // pred_fallthru
          _
      $region40: #{tpu_custom_call.1} parent=5 // pred_fallthru
        _
    $region6: #{tpu_custom_call.1} parent=1 // loop_footer
      %s18 = sadd.s32 1, %s14
    $region7: #{tpu_custom_call.1} parent=1 // loop_footer_branch
      %13 = sbr.rel target = $region3
    $region8: #{tpu_custom_call.1} parent=1 // loop_exit
      _
    %2642 = vsyncpa [#allocation3], 1
    %s2643 = scalar_lea.sflag [#allocation3], 1
    %2644 = vsyncpa %s2643, 1
    %2645 = vsyncpa [#allocation4], 1
    %s2646 = scalar_lea.sflag [#allocation4], 1
    %2647 = vsyncpa %s2646, 1

</llo_original>
